<compile_context>
chip_gen: v5e
topology: v5e:2x2
jax: 0.10.0
libtpu: 0.0.40
codegen_flags: <defaults>
</compile_context>

<pallas_src>
import functools

import jax
import jax.numpy as jnp
from jax import lax
from jax.experimental import pallas as pl
from jax.experimental.pallas import tpu as pltpu

LN_EPS = 1e-5  # PyTorch nn.LayerNorm default


def _layernorm_fused(z, gamma, beta):
    """LayerNorm with a single cross-lane reduction.

    sum(z) and sum(z*z) are obtained from ONE XLU reduction by stacking
    [z; z*z] along the sublane axis; var = E[z^2] - mu^2 keeps the two
    statistics independent instead of serialized through d = z - mu.
    """
    rows = z.shape[0]
    stacked = jnp.concatenate([z, z * z], axis=0)           # [2*rows, L]
    stats = jnp.mean(stacked, axis=-1, keepdims=True)       # [2*rows, 1]
    mu = stats[:rows]
    var = jnp.maximum(stats[rows:] - mu * mu, 0.0)          # guard tiny negatives
    return (z - mu) * lax.rsqrt(var + LN_EPS) * gamma + beta


def _layernorm_ref(z, gamma, beta):
    # Centered two-pass form, used only by the pure-JAX reference.
    mu = jnp.mean(z, axis=-1, keepdims=True)
    d = z - mu
    var = jnp.mean(d * d, axis=-1, keepdims=True)
    return d * lax.rsqrt(var + LN_EPS) * gamma + beta


def lnlstm_kernel(x_ref, h0_ref, c0_ref, wih_ref, whh_ref,
                  gi_ref, bi_ref, gh_ref, bh_ref, gc_ref, bc_ref,
                  y_ref, hT_ref, cT_ref, *, seq_len, batch, hidden):
    T, B, H = seq_len, batch, hidden

    # ---- hoisted: input projection + LayerNorm for ALL timesteps at once ----
    # [T*B, D_in] @ [D_in, 4H] in bf16 on the MXU, f32 accumulation + LN.
    x_bf = x_ref[...].astype(jnp.bfloat16)
    ig_all = _layernorm_fused(
        jnp.dot(x_bf, wih_ref[...], preferred_element_type=jnp.float32),
        gi_ref[...], bi_ref[...])                            # [T*B, 4H] f32

    # ---- hoisted parameter loads (no per-step re-broadcast) ----
    w_hh = whh_ref[...]                                      # bf16 [H, 4H]
    gh = gh_ref[...]; bh = bh_ref[...]
    gc = gc_ref[...]; bc = bc_ref[...]

    h = h0_ref[...].astype(jnp.float32)
    c = c0_ref[...].astype(jnp.float32)

    ys = []
    # Static Python loop: T is small, so full unroll with static slices is the
    # cheapest form (no scratch, no dynamic-slice address math on the critical
    # path). See TODO above for the large-T chunked variant.
    for t in range(T):
        ig_t = ig_all[t * B:(t + 1) * B, :]                  # [B, 4H] static sublane slice

        hg = _layernorm_fused(
            jnp.dot(h.astype(jnp.bfloat16), w_hh,
                    preferred_element_type=jnp.float32),
            gh, bh)
        gates = ig_t + hg                                    # [B, 4H] f32

        # sigmoid on the full 4H-lane vreg; tanh only on the g-gate slice.
        sig = jax.nn.sigmoid(gates)
        i_g = sig[:, 0 * H:1 * H]
        f_g = sig[:, 1 * H:2 * H]
        o_g = sig[:, 3 * H:4 * H]
        g_g = jnp.tanh(gates[:, 2 * H:3 * H])

        c = _layernorm_fused(f_g * c + i_g * g_g, gc, bc)
        h = o_g * jnp.tanh(c)
        ys.append(h)

    # Lane-dense output: single [B, T*H] store; wrapper reshapes to [T, B, H].
    y_ref[...] = jnp.concatenate(ys, axis=-1).astype(y_ref.dtype)
    # Final states written exactly once.
    hT_ref[...] = h.astype(hT_ref.dtype)
    cT_ref[...] = c.astype(cT_ref.dtype)


def featurenet_forward(x, h0, c0, params):
    """x: [T, B, D_in]; h0, c0: [B, H]. Returns (y [T, B, H], (hT, cT))."""
    T, B, D_in = x.shape
    H = h0.shape[-1]
    (w_ih, w_hh, gi, bi, gh, bh, gc, bc) = params

    # Pre-transpose + downcast weights: kernel does [rows, D] @ [D, 4H] with
    # bf16 MXU operands (halves the weight DMA); LN params stay f32.
    w_ih_t = jnp.asarray(w_ih.T, dtype=jnp.bfloat16)         # [D_in, 4H]
    w_hh_t = jnp.asarray(w_hh.T, dtype=jnp.bfloat16)         # [H, 4H]
    gi2 = gi.reshape(1, 4 * H); bi2 = bi.reshape(1, 4 * H)
    gh2 = gh.reshape(1, 4 * H); bh2 = bh.reshape(1, 4 * H)
    gc2 = gc.reshape(1, H); bc2 = bc.reshape(1, H)

    # Time-major flatten: row t*B + b of x2d is x[t, b, :].
    x2d = x.reshape(T * B, D_in)

    kernel = functools.partial(lnlstm_kernel, seq_len=T, batch=B, hidden=H)
    vmem = pl.BlockSpec(memory_space=pltpu.MemorySpace.VMEM)

    y2d, hT, cT = pl.pallas_call(
        kernel,
        out_shape=(
            jax.ShapeDtypeStruct((B, T * H), x.dtype),       # lane-dense y
            jax.ShapeDtypeStruct((B, H), x.dtype),
            jax.ShapeDtypeStruct((B, H), x.dtype),
        ),
        in_specs=[vmem] * 11,
        out_specs=(vmem, vmem, vmem),
    )(x2d, h0, c0, w_ih_t, w_hh_t, gi2, bi2, gh2, bh2, gc2, bc2)

    # [B, T*H] -> [B, T, H] -> [T, B, H]
    y = y2d.reshape(B, T, H).transpose(1, 0, 2)
    return y, (hT, cT)


def lnlstm_reference(x, h0, c0, params):
    (w_ih, w_hh, gi, bi, gh, bh, gc, bc) = params

    def step(carry, x_t):
        h, c = carry
        ig = _layernorm_ref(x_t @ w_ih.T, gi, bi)
        hg = _layernorm_ref(h @ w_hh.T, gh, bh)
        i_g, f_g, g_g, o_g = jnp.split(ig + hg, 4, axis=-1)
        c_new = _layernorm_ref(jax.nn.sigmoid(f_g) * c
                               + jax.nn.sigmoid(i_g) * jnp.tanh(g_g), gc, bc)
        h_new = jax.nn.sigmoid(o_g) * jnp.tanh(c_new)
        return (h_new, c_new), h_new

    (hT, cT), ys = jax.lax.scan(step, (h0, c0), x)
    return ys, (hT, cT)


if __name__ == "__main__":
    # Small, forward-consistent shapes:
    #   flatdim(observation_space) = 16, rnn.size = 32, seq = 8, batch = 8.
    T, B, D_IN, H = 8, 8, 16, 32

    key = jax.random.PRNGKey(0)
    kx, kh, kc, kw1, kw2 = jax.random.split(key, 5)

    x = jax.random.normal(kx, (T, B, D_IN), dtype=jnp.float32)
    h0 = jax.random.normal(kh, (B, H), dtype=jnp.float32)
    c0 = jax.random.normal(kc, (B, H), dtype=jnp.float32)

    # Deterministic PyTorch-LSTM-style uniform(-1/sqrt(H), 1/sqrt(H)) init;
    # LayerNorm defaults gamma=1, beta=0.
    bound = 1.0 / jnp.sqrt(jnp.float32(H))
    w_ih = jax.random.uniform(kw1, (4 * H, D_IN), jnp.float32, -bound, bound)
    w_hh = jax.random.uniform(kw2, (4 * H, H), jnp.float32, -bound, bound)
    gi = jnp.ones((4 * H,), jnp.float32); bi = jnp.zeros((4 * H,), jnp.float32)
    gh = jnp.ones((4 * H,), jnp.float32); bh = jnp.zeros((4 * H,), jnp.float32)
    gc = jnp.ones((H,), jnp.float32); bc = jnp.zeros((H,), jnp.float32)
    params = (w_ih, w_hh, gi, bi, gh, bh, gc, bc)

    y, (hT, cT) = featurenet_forward(x, h0, c0, params)
    jax.block_until_ready((y, hT, cT))

    # Tolerance relaxed (was 1e-4) because the kernel now feeds the MXU bf16
    # operands while the reference is pure f32; gate math stays f32 so the
    # drift over 8 recurrence steps remains far below structural-bug scale.
    y_ref, (hT_ref, cT_ref) = lnlstm_reference(x, h0, c0, params)
    assert jnp.allclose(y, y_ref, atol=3e-2, rtol=3e-2)
    assert jnp.allclose(hT, hT_ref, atol=3e-2, rtol=3e-2)
    assert jnp.allclose(cT, cT_ref, atol=3e-2, rtol=3e-2)

    print("KERNEL_OK")
</pallas_src>

<mosaic_0001>
module attributes {stable_mosaic.version = 11 : i64} {
  func.func @lnlstm_kernel(%arg0: memref<64x16xf32, #tpu.memory_space<vmem>>, %arg1: memref<8x32xf32, #tpu.memory_space<vmem>>, %arg2: memref<8x32xf32, #tpu.memory_space<vmem>>, %arg3: memref<16x128xbf16, #tpu.memory_space<vmem>>, %arg4: memref<32x128xbf16, #tpu.memory_space<vmem>>, %arg5: memref<1x128xf32, #tpu.memory_space<vmem>>, %arg6: memref<1x128xf32, #tpu.memory_space<vmem>>, %arg7: memref<1x128xf32, #tpu.memory_space<vmem>>, %arg8: memref<1x128xf32, #tpu.memory_space<vmem>>, %arg9: memref<1x32xf32, #tpu.memory_space<vmem>>, %arg10: memref<1x32xf32, #tpu.memory_space<vmem>>, %arg11: memref<8x256xf32, #tpu.memory_space<vmem>>, %arg12: memref<8x32xf32, #tpu.memory_space<vmem>>, %arg13: memref<8x32xf32, #tpu.memory_space<vmem>>) attributes {dimension_semantics = [], scalar_prefetch = 0 : i64, scratch_operands = 0 : i64, tpu.core_type = #tpu.core_type<tc>} {
    %c0 = arith.constant 0 : index
    %c0_0 = arith.constant 0 : index
    %0 = vector.load %arg0[%c0, %c0_0] : memref<64x16xf32, #tpu.memory_space<vmem>>, vector<64x16xf32>
    %1 = arith.truncf %0 : vector<64x16xf32> to vector<64x16xbf16>
    %c0_1 = arith.constant 0 : index
    %c0_2 = arith.constant 0 : index
    %2 = vector.load %arg3[%c0_1, %c0_2] : memref<16x128xbf16, #tpu.memory_space<vmem>>, vector<16x128xbf16>
    %cst = arith.constant dense<0.000000e+00> : vector<64x128xf32>
    %3 = tpu.matmul %1, %2, %cst {dimension_numbers = #tpu.dot_dimension_numbers<[1], [0], [0], [1], [0, 0, 1, 1], [], []>} : vector<64x16xbf16>, vector<16x128xbf16>, vector<64x128xf32> -> vector<64x128xf32>
    %c0_3 = arith.constant 0 : index
    %c0_4 = arith.constant 0 : index
    %4 = vector.load %arg5[%c0_3, %c0_4] : memref<1x128xf32, #tpu.memory_space<vmem>>, vector<1x128xf32>
    %c0_5 = arith.constant 0 : index
    %c0_6 = arith.constant 0 : index
    %5 = vector.load %arg6[%c0_5, %c0_6] : memref<1x128xf32, #tpu.memory_space<vmem>>, vector<1x128xf32>
    %6 = arith.mulf %3, %3 : vector<64x128xf32>
    %7 = tpu.concatenate %3, %6 in 0 : vector<64x128xf32>, vector<64x128xf32> -> vector<128x128xf32>
    %cst_7 = arith.constant dense<0.000000e+00> : vector<128xf32>
    %8 = vector.multi_reduction <add>, %7, %cst_7 [1] : vector<128x128xf32> to vector<128xf32>
    %9 = vector.shape_cast %8 : vector<128xf32> to vector<128x1xf32>
    %cst_8 = arith.constant 1.280000e+02 : f32
    %10 = vector.broadcast %cst_8 : f32 to vector<128x1xf32>
    %11 = arith.divf %9, %10 : vector<128x1xf32>
    %12 = vector.extract_strided_slice %11 {offsets = [0, 0], sizes = [64, 1], strides = [1, 1]} : vector<128x1xf32> to vector<64x1xf32>
    %13 = vector.extract_strided_slice %11 {offsets = [64, 0], sizes = [64, 1], strides = [1, 1]} : vector<128x1xf32> to vector<64x1xf32>
    %14 = arith.mulf %12, %12 : vector<64x1xf32>
    %15 = arith.subf %13, %14 : vector<64x1xf32>
    %cst_9 = arith.constant 0.000000e+00 : f32
    %16 = vector.broadcast %cst_9 : f32 to vector<64x1xf32>
    %17 = arith.maximumf %15, %16 : vector<64x1xf32>
    %18 = vector.broadcast %12 : vector<64x1xf32> to vector<64x128xf32>
    %19 = arith.subf %3, %18 : vector<64x128xf32>
    %cst_10 = arith.constant 9.99999974E-6 : f32
    %20 = vector.broadcast %cst_10 : f32 to vector<64x1xf32>
    %21 = arith.addf %17, %20 : vector<64x1xf32>
    %22 = math.rsqrt %21 : vector<64x1xf32>
    %23 = vector.broadcast %22 : vector<64x1xf32> to vector<64x128xf32>
    %24 = arith.mulf %19, %23 : vector<64x128xf32>
    %25 = vector.broadcast %4 : vector<1x128xf32> to vector<64x128xf32>
    %26 = arith.mulf %24, %25 : vector<64x128xf32>
    %27 = vector.broadcast %5 : vector<1x128xf32> to vector<64x128xf32>
    %28 = arith.addf %26, %27 : vector<64x128xf32>
    %c0_11 = arith.constant 0 : index
    %c0_12 = arith.constant 0 : index
    %29 = vector.load %arg4[%c0_11, %c0_12] : memref<32x128xbf16, #tpu.memory_space<vmem>>, vector<32x128xbf16>
    %c0_13 = arith.constant 0 : index
    %c0_14 = arith.constant 0 : index
    %30 = vector.load %arg7[%c0_13, %c0_14] : memref<1x128xf32, #tpu.memory_space<vmem>>, vector<1x128xf32>
    %c0_15 = arith.constant 0 : index
    %c0_16 = arith.constant 0 : index
    %31 = vector.load %arg8[%c0_15, %c0_16] : memref<1x128xf32, #tpu.memory_space<vmem>>, vector<1x128xf32>
    %c0_17 = arith.constant 0 : index
    %c0_18 = arith.constant 0 : index
    %32 = vector.load %arg9[%c0_17, %c0_18] : memref<1x32xf32, #tpu.memory_space<vmem>>, vector<1x32xf32>
    %c0_19 = arith.constant 0 : index
    %c0_20 = arith.constant 0 : index
    %33 = vector.load %arg10[%c0_19, %c0_20] : memref<1x32xf32, #tpu.memory_space<vmem>>, vector<1x32xf32>
    %c0_21 = arith.constant 0 : index
    %c0_22 = arith.constant 0 : index
    %34 = vector.load %arg1[%c0_21, %c0_22] : memref<8x32xf32, #tpu.memory_space<vmem>>, vector<8x32xf32>
    %c0_23 = arith.constant 0 : index
    %c0_24 = arith.constant 0 : index
    %35 = vector.load %arg2[%c0_23, %c0_24] : memref<8x32xf32, #tpu.memory_space<vmem>>, vector<8x32xf32>
    %36 = vector.extract_strided_slice %28 {offsets = [0, 0], sizes = [8, 128], strides = [1, 1]} : vector<64x128xf32> to vector<8x128xf32>
    %37 = arith.truncf %34 : vector<8x32xf32> to vector<8x32xbf16>
    %cst_25 = arith.constant dense<0.000000e+00> : vector<8x128xf32>
    %38 = tpu.matmul %37, %29, %cst_25 {dimension_numbers = #tpu.dot_dimension_numbers<[1], [0], [0], [1], [0, 0, 1, 1], [], []>} : vector<8x32xbf16>, vector<32x128xbf16>, vector<8x128xf32> -> vector<8x128xf32>
    %39 = arith.mulf %38, %38 : vector<8x128xf32>
    %40 = tpu.concatenate %38, %39 in 0 : vector<8x128xf32>, vector<8x128xf32> -> vector<16x128xf32>
    %cst_26 = arith.constant dense<0.000000e+00> : vector<16xf32>
    %41 = vector.multi_reduction <add>, %40, %cst_26 [1] : vector<16x128xf32> to vector<16xf32>
    %42 = vector.shape_cast %41 : vector<16xf32> to vector<16x1xf32>
    %cst_27 = arith.constant 1.280000e+02 : f32
    %43 = vector.broadcast %cst_27 : f32 to vector<16x1xf32>
    %44 = arith.divf %42, %43 : vector<16x1xf32>
    %45 = vector.extract_strided_slice %44 {offsets = [0, 0], sizes = [8, 1], strides = [1, 1]} : vector<16x1xf32> to vector<8x1xf32>
    %46 = vector.extract_strided_slice %44 {offsets = [8, 0], sizes = [8, 1], strides = [1, 1]} : vector<16x1xf32> to vector<8x1xf32>
    %47 = arith.mulf %45, %45 : vector<8x1xf32>
    %48 = arith.subf %46, %47 : vector<8x1xf32>
    %cst_28 = arith.constant 0.000000e+00 : f32
    %49 = vector.broadcast %cst_28 : f32 to vector<8x1xf32>
    %50 = arith.maximumf %48, %49 : vector<8x1xf32>
    %51 = vector.broadcast %45 : vector<8x1xf32> to vector<8x128xf32>
    %52 = arith.subf %38, %51 : vector<8x128xf32>
    %cst_29 = arith.constant 9.99999974E-6 : f32
    %53 = vector.broadcast %cst_29 : f32 to vector<8x1xf32>
    %54 = arith.addf %50, %53 : vector<8x1xf32>
    %55 = math.rsqrt %54 : vector<8x1xf32>
    %56 = vector.broadcast %55 : vector<8x1xf32> to vector<8x128xf32>
    %57 = arith.mulf %52, %56 : vector<8x128xf32>
    %58 = vector.broadcast %30 : vector<1x128xf32> to vector<8x128xf32>
    %59 = arith.mulf %57, %58 : vector<8x128xf32>
    %60 = vector.broadcast %31 : vector<1x128xf32> to vector<8x128xf32>
    %61 = arith.addf %59, %60 : vector<8x128xf32>
    %62 = arith.addf %36, %61 : vector<8x128xf32>
    %63 = arith.negf %62 : vector<8x128xf32>
    %64 = math.exp %63 : vector<8x128xf32>
    %cst_30 = arith.constant 1.000000e+00 : f32
    %65 = vector.broadcast %cst_30 : f32 to vector<8x128xf32>
    %66 = arith.addf %65, %64 : vector<8x128xf32>
    %67 = arith.divf %65, %66 : vector<8x128xf32>
    %68 = vector.extract_strided_slice %67 {offsets = [0, 0], sizes = [8, 32], strides = [1, 1]} : vector<8x128xf32> to vector<8x32xf32>
    %69 = vector.extract_strided_slice %67 {offsets = [0, 32], sizes = [8, 32], strides = [1, 1]} : vector<8x128xf32> to vector<8x32xf32>
    %70 = vector.extract_strided_slice %67 {offsets = [0, 96], sizes = [8, 32], strides = [1, 1]} : vector<8x128xf32> to vector<8x32xf32>
    %71 = vector.extract_strided_slice %62 {offsets = [0, 64], sizes = [8, 32], strides = [1, 1]} : vector<8x128xf32> to vector<8x32xf32>
    %72 = math.tanh %71 : vector<8x32xf32>
    %73 = arith.mulf %69, %35 : vector<8x32xf32>
    %74 = arith.mulf %68, %72 : vector<8x32xf32>
    %75 = arith.addf %73, %74 : vector<8x32xf32>
    %76 = arith.mulf %75, %75 : vector<8x32xf32>
    %77 = tpu.concatenate %75, %76 in 0 : vector<8x32xf32>, vector<8x32xf32> -> vector<16x32xf32>
    %cst_31 = arith.constant dense<0.000000e+00> : vector<16xf32>
    %78 = vector.multi_reduction <add>, %77, %cst_31 [1] : vector<16x32xf32> to vector<16xf32>
    %79 = vector.shape_cast %78 : vector<16xf32> to vector<16x1xf32>
    %cst_32 = arith.constant 3.200000e+01 : f32
    %80 = vector.broadcast %cst_32 : f32 to vector<16x1xf32>
    %81 = arith.divf %79, %80 : vector<16x1xf32>
    %82 = vector.extract_strided_slice %81 {offsets = [0, 0], sizes = [8, 1], strides = [1, 1]} : vector<16x1xf32> to vector<8x1xf32>
    %83 = vector.extract_strided_slice %81 {offsets = [8, 0], sizes = [8, 1], strides = [1, 1]} : vector<16x1xf32> to vector<8x1xf32>
    %84 = arith.mulf %82, %82 : vector<8x1xf32>
    %85 = arith.subf %83, %84 : vector<8x1xf32>
    %cst_33 = arith.constant 0.000000e+00 : f32
    %86 = vector.broadcast %cst_33 : f32 to vector<8x1xf32>
    %87 = arith.maximumf %85, %86 : vector<8x1xf32>
    %88 = vector.broadcast %82 : vector<8x1xf32> to vector<8x32xf32>
    %89 = arith.subf %75, %88 : vector<8x32xf32>
    %cst_34 = arith.constant 9.99999974E-6 : f32
    %90 = vector.broadcast %cst_34 : f32 to vector<8x1xf32>
    %91 = arith.addf %87, %90 : vector<8x1xf32>
    %92 = math.rsqrt %91 : vector<8x1xf32>
    %93 = vector.broadcast %92 : vector<8x1xf32> to vector<8x32xf32>
    %94 = arith.mulf %89, %93 : vector<8x32xf32>
    %95 = vector.broadcast %32 : vector<1x32xf32> to vector<8x32xf32>
    %96 = arith.mulf %94, %95 : vector<8x32xf32>
    %97 = vector.broadcast %33 : vector<1x32xf32> to vector<8x32xf32>
    %98 = arith.addf %96, %97 : vector<8x32xf32>
    %99 = math.tanh %98 : vector<8x32xf32>
    %100 = arith.mulf %70, %99 : vector<8x32xf32>
    %101 = vector.extract_strided_slice %28 {offsets = [8, 0], sizes = [8, 128], strides = [1, 1]} : vector<64x128xf32> to vector<8x128xf32>
    %102 = arith.truncf %100 : vector<8x32xf32> to vector<8x32xbf16>
    %cst_35 = arith.constant dense<0.000000e+00> : vector<8x128xf32>
    %103 = tpu.matmul %102, %29, %cst_35 {dimension_numbers = #tpu.dot_dimension_numbers<[1], [0], [0], [1], [0, 0, 1, 1], [], []>} : vector<8x32xbf16>, vector<32x128xbf16>, vector<8x128xf32> -> vector<8x128xf32>
    %104 = arith.mulf %103, %103 : vector<8x128xf32>
    %105 = tpu.concatenate %103, %104 in 0 : vector<8x128xf32>, vector<8x128xf32> -> vector<16x128xf32>
    %cst_36 = arith.constant dense<0.000000e+00> : vector<16xf32>
    %106 = vector.multi_reduction <add>, %105, %cst_36 [1] : vector<16x128xf32> to vector<16xf32>
    %107 = vector.shape_cast %106 : vector<16xf32> to vector<16x1xf32>
    %cst_37 = arith.constant 1.280000e+02 : f32
    %108 = vector.broadcast %cst_37 : f32 to vector<16x1xf32>
    %109 = arith.divf %107, %108 : vector<16x1xf32>
    %110 = vector.extract_strided_slice %109 {offsets = [0, 0], sizes = [8, 1], strides = [1, 1]} : vector<16x1xf32> to vector<8x1xf32>
    %111 = vector.extract_strided_slice %109 {offsets = [8, 0], sizes = [8, 1], strides = [1, 1]} : vector<16x1xf32> to vector<8x1xf32>
    %112 = arith.mulf %110, %110 : vector<8x1xf32>
    %113 = arith.subf %111, %112 : vector<8x1xf32>
    %cst_38 = arith.constant 0.000000e+00 : f32
    %114 = vector.broadcast %cst_38 : f32 to vector<8x1xf32>
    %115 = arith.maximumf %113, %114 : vector<8x1xf32>
    %116 = vector.broadcast %110 : vector<8x1xf32> to vector<8x128xf32>
    %117 = arith.subf %103, %116 : vector<8x128xf32>
    %cst_39 = arith.constant 9.99999974E-6 : f32
    %118 = vector.broadcast %cst_39 : f32 to vector<8x1xf32>
    %119 = arith.addf %115, %118 : vector<8x1xf32>
    %120 = math.rsqrt %119 : vector<8x1xf32>
    %121 = vector.broadcast %120 : vector<8x1xf32> to vector<8x128xf32>
    %122 = arith.mulf %117, %121 : vector<8x128xf32>
    %123 = vector.broadcast %30 : vector<1x128xf32> to vector<8x128xf32>
    %124 = arith.mulf %122, %123 : vector<8x128xf32>
    %125 = vector.broadcast %31 : vector<1x128xf32> to vector<8x128xf32>
    %126 = arith.addf %124, %125 : vector<8x128xf32>
    %127 = arith.addf %101, %126 : vector<8x128xf32>
    %128 = arith.negf %127 : vector<8x128xf32>
    %129 = math.exp %128 : vector<8x128xf32>
    %cst_40 = arith.constant 1.000000e+00 : f32
    %130 = vector.broadcast %cst_40 : f32 to vector<8x128xf32>
    %131 = arith.addf %130, %129 : vector<8x128xf32>
    %132 = arith.divf %130, %131 : vector<8x128xf32>
    %133 = vector.extract_strided_slice %132 {offsets = [0, 0], sizes = [8, 32], strides = [1, 1]} : vector<8x128xf32> to vector<8x32xf32>
    %134 = vector.extract_strided_slice %132 {offsets = [0, 32], sizes = [8, 32], strides = [1, 1]} : vector<8x128xf32> to vector<8x32xf32>
    %135 = vector.extract_strided_slice %132 {offsets = [0, 96], sizes = [8, 32], strides = [1, 1]} : vector<8x128xf32> to vector<8x32xf32>
    %136 = vector.extract_strided_slice %127 {offsets = [0, 64], sizes = [8, 32], strides = [1, 1]} : vector<8x128xf32> to vector<8x32xf32>
    %137 = math.tanh %136 : vector<8x32xf32>
    %138 = arith.mulf %134, %98 : vector<8x32xf32>
    %139 = arith.mulf %133, %137 : vector<8x32xf32>
    %140 = arith.addf %138, %139 : vector<8x32xf32>
    %141 = arith.mulf %140, %140 : vector<8x32xf32>
    %142 = tpu.concatenate %140, %141 in 0 : vector<8x32xf32>, vector<8x32xf32> -> vector<16x32xf32>
    %cst_41 = arith.constant dense<0.000000e+00> : vector<16xf32>
    %143 = vector.multi_reduction <add>, %142, %cst_41 [1] : vector<16x32xf32> to vector<16xf32>
    %144 = vector.shape_cast %143 : vector<16xf32> to vector<16x1xf32>
    %cst_42 = arith.constant 3.200000e+01 : f32
    %145 = vector.broadcast %cst_42 : f32 to vector<16x1xf32>
    %146 = arith.divf %144, %145 : vector<16x1xf32>
    %147 = vector.extract_strided_slice %146 {offsets = [0, 0], sizes = [8, 1], strides = [1, 1]} : vector<16x1xf32> to vector<8x1xf32>
    %148 = vector.extract_strided_slice %146 {offsets = [8, 0], sizes = [8, 1], strides = [1, 1]} : vector<16x1xf32> to vector<8x1xf32>
    %149 = arith.mulf %147, %147 : vector<8x1xf32>
    %150 = arith.subf %148, %149 : vector<8x1xf32>
    %cst_43 = arith.constant 0.000000e+00 : f32
    %151 = vector.broadcast %cst_43 : f32 to vector<8x1xf32>
    %152 = arith.maximumf %150, %151 : vector<8x1xf32>
    %153 = vector.broadcast %147 : vector<8x1xf32> to vector<8x32xf32>
    %154 = arith.subf %140, %153 : vector<8x32xf32>
    %cst_44 = arith.constant 9.99999974E-6 : f32
    %155 = vector.broadcast %cst_44 : f32 to vector<8x1xf32>
    %156 = arith.addf %152, %155 : vector<8x1xf32>
    %157 = math.rsqrt %156 : vector<8x1xf32>
    %158 = vector.broadcast %157 : vector<8x1xf32> to vector<8x32xf32>
    %159 = arith.mulf %154, %158 : vector<8x32xf32>
    %160 = vector.broadcast %32 : vector<1x32xf32> to vector<8x32xf32>
    %161 = arith.mulf %159, %160 : vector<8x32xf32>
    %162 = vector.broadcast %33 : vector<1x32xf32> to vector<8x32xf32>
    %163 = arith.addf %161, %162 : vector<8x32xf32>
    %164 = math.tanh %163 : vector<8x32xf32>
    %165 = arith.mulf %135, %164 : vector<8x32xf32>
    %166 = vector.extract_strided_slice %28 {offsets = [16, 0], sizes = [8, 128], strides = [1, 1]} : vector<64x128xf32> to vector<8x128xf32>
    %167 = arith.truncf %165 : vector<8x32xf32> to vector<8x32xbf16>
    %cst_45 = arith.constant dense<0.000000e+00> : vector<8x128xf32>
    %168 = tpu.matmul %167, %29, %cst_45 {dimension_numbers = #tpu.dot_dimension_numbers<[1], [0], [0], [1], [0, 0, 1, 1], [], []>} : vector<8x32xbf16>, vector<32x128xbf16>, vector<8x128xf32> -> vector<8x128xf32>
    %169 = arith.mulf %168, %168 : vector<8x128xf32>
    %170 = tpu.concatenate %168, %169 in 0 : vector<8x128xf32>, vector<8x128xf32> -> vector<16x128xf32>
    %cst_46 = arith.constant dense<0.000000e+00> : vector<16xf32>
    %171 = vector.multi_reduction <add>, %170, %cst_46 [1] : vector<16x128xf32> to vector<16xf32>
    %172 = vector.shape_cast %171 : vector<16xf32> to vector<16x1xf32>
    %cst_47 = arith.constant 1.280000e+02 : f32
    %173 = vector.broadcast %cst_47 : f32 to vector<16x1xf32>
    %174 = arith.divf %172, %173 : vector<16x1xf32>
    %175 = vector.extract_strided_slice %174 {offsets = [0, 0], sizes = [8, 1], strides = [1, 1]} : vector<16x1xf32> to vector<8x1xf32>
    %176 = vector.extract_strided_slice %174 {offsets = [8, 0], sizes = [8, 1], strides = [1, 1]} : vector<16x1xf32> to vector<8x1xf32>
    %177 = arith.mulf %175, %175 : vector<8x1xf32>
    %178 = arith.subf %176, %177 : vector<8x1xf32>
    %cst_48 = arith.constant 0.000000e+00 : f32
    %179 = vector.broadcast %cst_48 : f32 to vector<8x1xf32>
    %180 = arith.maximumf %178, %179 : vector<8x1xf32>
    %181 = vector.broadcast %175 : vector<8x1xf32> to vector<8x128xf32>
    %182 = arith.subf %168, %181 : vector<8x128xf32>
    %cst_49 = arith.constant 9.99999974E-6 : f32
    %183 = vector.broadcast %cst_49 : f32 to vector<8x1xf32>
    %184 = arith.addf %180, %183 : vector<8x1xf32>
    %185 = math.rsqrt %184 : vector<8x1xf32>
    %186 = vector.broadcast %185 : vector<8x1xf32> to vector<8x128xf32>
    %187 = arith.mulf %182, %186 : vector<8x128xf32>
    %188 = vector.broadcast %30 : vector<1x128xf32> to vector<8x128xf32>
    %189 = arith.mulf %187, %188 : vector<8x128xf32>
    %190 = vector.broadcast %31 : vector<1x128xf32> to vector<8x128xf32>
    %191 = arith.addf %189, %190 : vector<8x128xf32>
    %192 = arith.addf %166, %191 : vector<8x128xf32>
    %193 = arith.negf %192 : vector<8x128xf32>
    %194 = math.exp %193 : vector<8x128xf32>
    %cst_50 = arith.constant 1.000000e+00 : f32
    %195 = vector.broadcast %cst_50 : f32 to vector<8x128xf32>
    %196 = arith.addf %195, %194 : vector<8x128xf32>
    %197 = arith.divf %195, %196 : vector<8x128xf32>
    %198 = vector.extract_strided_slice %197 {offsets = [0, 0], sizes = [8, 32], strides = [1, 1]} : vector<8x128xf32> to vector<8x32xf32>
    %199 = vector.extract_strided_slice %197 {offsets = [0, 32], sizes = [8, 32], strides = [1, 1]} : vector<8x128xf32> to vector<8x32xf32>
    %200 = vector.extract_strided_slice %197 {offsets = [0, 96], sizes = [8, 32], strides = [1, 1]} : vector<8x128xf32> to vector<8x32xf32>
    %201 = vector.extract_strided_slice %192 {offsets = [0, 64], sizes = [8, 32], strides = [1, 1]} : vector<8x128xf32> to vector<8x32xf32>
    %202 = math.tanh %201 : vector<8x32xf32>
    %203 = arith.mulf %199, %163 : vector<8x32xf32>
    %204 = arith.mulf %198, %202 : vector<8x32xf32>
    %205 = arith.addf %203, %204 : vector<8x32xf32>
    %206 = arith.mulf %205, %205 : vector<8x32xf32>
    %207 = tpu.concatenate %205, %206 in 0 : vector<8x32xf32>, vector<8x32xf32> -> vector<16x32xf32>
    %cst_51 = arith.constant dense<0.000000e+00> : vector<16xf32>
    %208 = vector.multi_reduction <add>, %207, %cst_51 [1] : vector<16x32xf32> to vector<16xf32>
    %209 = vector.shape_cast %208 : vector<16xf32> to vector<16x1xf32>
    %cst_52 = arith.constant 3.200000e+01 : f32
    %210 = vector.broadcast %cst_52 : f32 to vector<16x1xf32>
    %211 = arith.divf %209, %210 : vector<16x1xf32>
    %212 = vector.extract_strided_slice %211 {offsets = [0, 0], sizes = [8, 1], strides = [1, 1]} : vector<16x1xf32> to vector<8x1xf32>
    %213 = vector.extract_strided_slice %211 {offsets = [8, 0], sizes = [8, 1], strides = [1, 1]} : vector<16x1xf32> to vector<8x1xf32>
    %214 = arith.mulf %212, %212 : vector<8x1xf32>
    %215 = arith.subf %213, %214 : vector<8x1xf32>
    %cst_53 = arith.constant 0.000000e+00 : f32
    %216 = vector.broadcast %cst_53 : f32 to vector<8x1xf32>
    %217 = arith.maximumf %215, %216 : vector<8x1xf32>
    %218 = vector.broadcast %212 : vector<8x1xf32> to vector<8x32xf32>
    %219 = arith.subf %205, %218 : vector<8x32xf32>
    %cst_54 = arith.constant 9.99999974E-6 : f32
    %220 = vector.broadcast %cst_54 : f32 to vector<8x1xf32>
    %221 = arith.addf %217, %220 : vector<8x1xf32>
    %222 = math.rsqrt %221 : vector<8x1xf32>
    %223 = vector.broadcast %222 : vector<8x1xf32> to vector<8x32xf32>
    %224 = arith.mulf %219, %223 : vector<8x32xf32>
    %225 = vector.broadcast %32 : vector<1x32xf32> to vector<8x32xf32>
    %226 = arith.mulf %224, %225 : vector<8x32xf32>
    %227 = vector.broadcast %33 : vector<1x32xf32> to vector<8x32xf32>
    %228 = arith.addf %226, %227 : vector<8x32xf32>
    %229 = math.tanh %228 : vector<8x32xf32>
    %230 = arith.mulf %200, %229 : vector<8x32xf32>
    %231 = vector.extract_strided_slice %28 {offsets = [24, 0], sizes = [8, 128], strides = [1, 1]} : vector<64x128xf32> to vector<8x128xf32>
    %232 = arith.truncf %230 : vector<8x32xf32> to vector<8x32xbf16>
    %cst_55 = arith.constant dense<0.000000e+00> : vector<8x128xf32>
    %233 = tpu.matmul %232, %29, %cst_55 {dimension_numbers = #tpu.dot_dimension_numbers<[1], [0], [0], [1], [0, 0, 1, 1], [], []>} : vector<8x32xbf16>, vector<32x128xbf16>, vector<8x128xf32> -> vector<8x128xf32>
    %234 = arith.mulf %233, %233 : vector<8x128xf32>
    %235 = tpu.concatenate %233, %234 in 0 : vector<8x128xf32>, vector<8x128xf32> -> vector<16x128xf32>
    %cst_56 = arith.constant dense<0.000000e+00> : vector<16xf32>
    %236 = vector.multi_reduction <add>, %235, %cst_56 [1] : vector<16x128xf32> to vector<16xf32>
    %237 = vector.shape_cast %236 : vector<16xf32> to vector<16x1xf32>
    %cst_57 = arith.constant 1.280000e+02 : f32
    %238 = vector.broadcast %cst_57 : f32 to vector<16x1xf32>
    %239 = arith.divf %237, %238 : vector<16x1xf32>
    %240 = vector.extract_strided_slice %239 {offsets = [0, 0], sizes = [8, 1], strides = [1, 1]} : vector<16x1xf32> to vector<8x1xf32>
    %241 = vector.extract_strided_slice %239 {offsets = [8, 0], sizes = [8, 1], strides = [1, 1]} : vector<16x1xf32> to vector<8x1xf32>
    %242 = arith.mulf %240, %240 : vector<8x1xf32>
    %243 = arith.subf %241, %242 : vector<8x1xf32>
    %cst_58 = arith.constant 0.000000e+00 : f32
    %244 = vector.broadcast %cst_58 : f32 to vector<8x1xf32>
    %245 = arith.maximumf %243, %244 : vector<8x1xf32>
    %246 = vector.broadcast %240 : vector<8x1xf32> to vector<8x128xf32>
    %247 = arith.subf %233, %246 : vector<8x128xf32>
    %cst_59 = arith.constant 9.99999974E-6 : f32
    %248 = vector.broadcast %cst_59 : f32 to vector<8x1xf32>
    %249 = arith.addf %245, %248 : vector<8x1xf32>
    %250 = math.rsqrt %249 : vector<8x1xf32>
    %251 = vector.broadcast %250 : vector<8x1xf32> to vector<8x128xf32>
    %252 = arith.mulf %247, %251 : vector<8x128xf32>
    %253 = vector.broadcast %30 : vector<1x128xf32> to vector<8x128xf32>
    %254 = arith.mulf %252, %253 : vector<8x128xf32>
    %255 = vector.broadcast %31 : vector<1x128xf32> to vector<8x128xf32>
    %256 = arith.addf %254, %255 : vector<8x128xf32>
    %257 = arith.addf %231, %256 : vector<8x128xf32>
    %258 = arith.negf %257 : vector<8x128xf32>
    %259 = math.exp %258 : vector<8x128xf32>
    %cst_60 = arith.constant 1.000000e+00 : f32
    %260 = vector.broadcast %cst_60 : f32 to vector<8x128xf32>
    %261 = arith.addf %260, %259 : vector<8x128xf32>
    %262 = arith.divf %260, %261 : vector<8x128xf32>
    %263 = vector.extract_strided_slice %262 {offsets = [0, 0], sizes = [8, 32], strides = [1, 1]} : vector<8x128xf32> to vector<8x32xf32>
    %264 = vector.extract_strided_slice %262 {offsets = [0, 32], sizes = [8, 32], strides = [1, 1]} : vector<8x128xf32> to vector<8x32xf32>
    %265 = vector.extract_strided_slice %262 {offsets = [0, 96], sizes = [8, 32], strides = [1, 1]} : vector<8x128xf32> to vector<8x32xf32>
    %266 = vector.extract_strided_slice %257 {offsets = [0, 64], sizes = [8, 32], strides = [1, 1]} : vector<8x128xf32> to vector<8x32xf32>
    %267 = math.tanh %266 : vector<8x32xf32>
    %268 = arith.mulf %264, %228 : vector<8x32xf32>
    %269 = arith.mulf %263, %267 : vector<8x32xf32>
    %270 = arith.addf %268, %269 : vector<8x32xf32>
    %271 = arith.mulf %270, %270 : vector<8x32xf32>
    %272 = tpu.concatenate %270, %271 in 0 : vector<8x32xf32>, vector<8x32xf32> -> vector<16x32xf32>
    %cst_61 = arith.constant dense<0.000000e+00> : vector<16xf32>
    %273 = vector.multi_reduction <add>, %272, %cst_61 [1] : vector<16x32xf32> to vector<16xf32>
    %274 = vector.shape_cast %273 : vector<16xf32> to vector<16x1xf32>
    %cst_62 = arith.constant 3.200000e+01 : f32
    %275 = vector.broadcast %cst_62 : f32 to vector<16x1xf32>
    %276 = arith.divf %274, %275 : vector<16x1xf32>
    %277 = vector.extract_strided_slice %276 {offsets = [0, 0], sizes = [8, 1], strides = [1, 1]} : vector<16x1xf32> to vector<8x1xf32>
    %278 = vector.extract_strided_slice %276 {offsets = [8, 0], sizes = [8, 1], strides = [1, 1]} : vector<16x1xf32> to vector<8x1xf32>
    %279 = arith.mulf %277, %277 : vector<8x1xf32>
    %280 = arith.subf %278, %279 : vector<8x1xf32>
    %cst_63 = arith.constant 0.000000e+00 : f32
    %281 = vector.broadcast %cst_63 : f32 to vector<8x1xf32>
    %282 = arith.maximumf %280, %281 : vector<8x1xf32>
    %283 = vector.broadcast %277 : vector<8x1xf32> to vector<8x32xf32>
    %284 = arith.subf %270, %283 : vector<8x32xf32>
    %cst_64 = arith.constant 9.99999974E-6 : f32
    %285 = vector.broadcast %cst_64 : f32 to vector<8x1xf32>
    %286 = arith.addf %282, %285 : vector<8x1xf32>
    %287 = math.rsqrt %286 : vector<8x1xf32>
    %288 = vector.broadcast %287 : vector<8x1xf32> to vector<8x32xf32>
    %289 = arith.mulf %284, %288 : vector<8x32xf32>
    %290 = vector.broadcast %32 : vector<1x32xf32> to vector<8x32xf32>
    %291 = arith.mulf %289, %290 : vector<8x32xf32>
    %292 = vector.broadcast %33 : vector<1x32xf32> to vector<8x32xf32>
    %293 = arith.addf %291, %292 : vector<8x32xf32>
    %294 = math.tanh %293 : vector<8x32xf32>
    %295 = arith.mulf %265, %294 : vector<8x32xf32>
    %296 = vector.extract_strided_slice %28 {offsets = [32, 0], sizes = [8, 128], strides = [1, 1]} : vector<64x128xf32> to vector<8x128xf32>
    %297 = arith.truncf %295 : vector<8x32xf32> to vector<8x32xbf16>
    %cst_65 = arith.constant dense<0.000000e+00> : vector<8x128xf32>
    %298 = tpu.matmul %297, %29, %cst_65 {dimension_numbers = #tpu.dot_dimension_numbers<[1], [0], [0], [1], [0, 0, 1, 1], [], []>} : vector<8x32xbf16>, vector<32x128xbf16>, vector<8x128xf32> -> vector<8x128xf32>
    %299 = arith.mulf %298, %298 : vector<8x128xf32>
    %300 = tpu.concatenate %298, %299 in 0 : vector<8x128xf32>, vector<8x128xf32> -> vector<16x128xf32>
    %cst_66 = arith.constant dense<0.000000e+00> : vector<16xf32>
    %301 = vector.multi_reduction <add>, %300, %cst_66 [1] : vector<16x128xf32> to vector<16xf32>
    %302 = vector.shape_cast %301 : vector<16xf32> to vector<16x1xf32>
    %cst_67 = arith.constant 1.280000e+02 : f32
    %303 = vector.broadcast %cst_67 : f32 to vector<16x1xf32>
    %304 = arith.divf %302, %303 : vector<16x1xf32>
    %305 = vector.extract_strided_slice %304 {offsets = [0, 0], sizes = [8, 1], strides = [1, 1]} : vector<16x1xf32> to vector<8x1xf32>
    %306 = vector.extract_strided_slice %304 {offsets = [8, 0], sizes = [8, 1], strides = [1, 1]} : vector<16x1xf32> to vector<8x1xf32>
    %307 = arith.mulf %305, %305 : vector<8x1xf32>
    %308 = arith.subf %306, %307 : vector<8x1xf32>
    %cst_68 = arith.constant 0.000000e+00 : f32
    %309 = vector.broadcast %cst_68 : f32 to vector<8x1xf32>
    %310 = arith.maximumf %308, %309 : vector<8x1xf32>
    %311 = vector.broadcast %305 : vector<8x1xf32> to vector<8x128xf32>
    %312 = arith.subf %298, %311 : vector<8x128xf32>
    %cst_69 = arith.constant 9.99999974E-6 : f32
    %313 = vector.broadcast %cst_69 : f32 to vector<8x1xf32>
    %314 = arith.addf %310, %313 : vector<8x1xf32>
    %315 = math.rsqrt %314 : vector<8x1xf32>
    %316 = vector.broadcast %315 : vector<8x1xf32> to vector<8x128xf32>
    %317 = arith.mulf %312, %316 : vector<8x128xf32>
    %318 = vector.broadcast %30 : vector<1x128xf32> to vector<8x128xf32>
    %319 = arith.mulf %317, %318 : vector<8x128xf32>
    %320 = vector.broadcast %31 : vector<1x128xf32> to vector<8x128xf32>
    %321 = arith.addf %319, %320 : vector<8x128xf32>
    %322 = arith.addf %296, %321 : vector<8x128xf32>
    %323 = arith.negf %322 : vector<8x128xf32>
    %324 = math.exp %323 : vector<8x128xf32>
    %cst_70 = arith.constant 1.000000e+00 : f32
    %325 = vector.broadcast %cst_70 : f32 to vector<8x128xf32>
    %326 = arith.addf %325, %324 : vector<8x128xf32>
    %327 = arith.divf %325, %326 : vector<8x128xf32>
    %328 = vector.extract_strided_slice %327 {offsets = [0, 0], sizes = [8, 32], strides = [1, 1]} : vector<8x128xf32> to vector<8x32xf32>
    %329 = vector.extract_strided_slice %327 {offsets = [0, 32], sizes = [8, 32], strides = [1, 1]} : vector<8x128xf32> to vector<8x32xf32>
    %330 = vector.extract_strided_slice %327 {offsets = [0, 96], sizes = [8, 32], strides = [1, 1]} : vector<8x128xf32> to vector<8x32xf32>
    %331 = vector.extract_strided_slice %322 {offsets = [0, 64], sizes = [8, 32], strides = [1, 1]} : vector<8x128xf32> to vector<8x32xf32>
    %332 = math.tanh %331 : vector<8x32xf32>
    %333 = arith.mulf %329, %293 : vector<8x32xf32>
    %334 = arith.mulf %328, %332 : vector<8x32xf32>
    %335 = arith.addf %333, %334 : vector<8x32xf32>
    %336 = arith.mulf %335, %335 : vector<8x32xf32>
    %337 = tpu.concatenate %335, %336 in 0 : vector<8x32xf32>, vector<8x32xf32> -> vector<16x32xf32>
    %cst_71 = arith.constant dense<0.000000e+00> : vector<16xf32>
    %338 = vector.multi_reduction <add>, %337, %cst_71 [1] : vector<16x32xf32> to vector<16xf32>
    %339 = vector.shape_cast %338 : vector<16xf32> to vector<16x1xf32>
    %cst_72 = arith.constant 3.200000e+01 : f32
    %340 = vector.broadcast %cst_72 : f32 to vector<16x1xf32>
    %341 = arith.divf %339, %340 : vector<16x1xf32>
    %342 = vector.extract_strided_slice %341 {offsets = [0, 0], sizes = [8, 1], strides = [1, 1]} : vector<16x1xf32> to vector<8x1xf32>
    %343 = vector.extract_strided_slice %341 {offsets = [8, 0], sizes = [8, 1], strides = [1, 1]} : vector<16x1xf32> to vector<8x1xf32>
    %344 = arith.mulf %342, %342 : vector<8x1xf32>
    %345 = arith.subf %343, %344 : vector<8x1xf32>
    %cst_73 = arith.constant 0.000000e+00 : f32
    %346 = vector.broadcast %cst_73 : f32 to vector<8x1xf32>
    %347 = arith.maximumf %345, %346 : vector<8x1xf32>
    %348 = vector.broadcast %342 : vector<8x1xf32> to vector<8x32xf32>
    %349 = arith.subf %335, %348 : vector<8x32xf32>
    %cst_74 = arith.constant 9.99999974E-6 : f32
    %350 = vector.broadcast %cst_74 : f32 to vector<8x1xf32>
    %351 = arith.addf %347, %350 : vector<8x1xf32>
    %352 = math.rsqrt %351 : vector<8x1xf32>
    %353 = vector.broadcast %352 : vector<8x1xf32> to vector<8x32xf32>
    %354 = arith.mulf %349, %353 : vector<8x32xf32>
    %355 = vector.broadcast %32 : vector<1x32xf32> to vector<8x32xf32>
    %356 = arith.mulf %354, %355 : vector<8x32xf32>
    %357 = vector.broadcast %33 : vector<1x32xf32> to vector<8x32xf32>
    %358 = arith.addf %356, %357 : vector<8x32xf32>
    %359 = math.tanh %358 : vector<8x32xf32>
    %360 = arith.mulf %330, %359 : vector<8x32xf32>
    %361 = vector.extract_strided_slice %28 {offsets = [40, 0], sizes = [8, 128], strides = [1, 1]} : vector<64x128xf32> to vector<8x128xf32>
    %362 = arith.truncf %360 : vector<8x32xf32> to vector<8x32xbf16>
    %cst_75 = arith.constant dense<0.000000e+00> : vector<8x128xf32>
    %363 = tpu.matmul %362, %29, %cst_75 {dimension_numbers = #tpu.dot_dimension_numbers<[1], [0], [0], [1], [0, 0, 1, 1], [], []>} : vector<8x32xbf16>, vector<32x128xbf16>, vector<8x128xf32> -> vector<8x128xf32>
    %364 = arith.mulf %363, %363 : vector<8x128xf32>
    %365 = tpu.concatenate %363, %364 in 0 : vector<8x128xf32>, vector<8x128xf32> -> vector<16x128xf32>
    %cst_76 = arith.constant dense<0.000000e+00> : vector<16xf32>
    %366 = vector.multi_reduction <add>, %365, %cst_76 [1] : vector<16x128xf32> to vector<16xf32>
    %367 = vector.shape_cast %366 : vector<16xf32> to vector<16x1xf32>
    %cst_77 = arith.constant 1.280000e+02 : f32
    %368 = vector.broadcast %cst_77 : f32 to vector<16x1xf32>
    %369 = arith.divf %367, %368 : vector<16x1xf32>
    %370 = vector.extract_strided_slice %369 {offsets = [0, 0], sizes = [8, 1], strides = [1, 1]} : vector<16x1xf32> to vector<8x1xf32>
    %371 = vector.extract_strided_slice %369 {offsets = [8, 0], sizes = [8, 1], strides = [1, 1]} : vector<16x1xf32> to vector<8x1xf32>
    %372 = arith.mulf %370, %370 : vector<8x1xf32>
    %373 = arith.subf %371, %372 : vector<8x1xf32>
    %cst_78 = arith.constant 0.000000e+00 : f32
    %374 = vector.broadcast %cst_78 : f32 to vector<8x1xf32>
    %375 = arith.maximumf %373, %374 : vector<8x1xf32>
    %376 = vector.broadcast %370 : vector<8x1xf32> to vector<8x128xf32>
    %377 = arith.subf %363, %376 : vector<8x128xf32>
    %cst_79 = arith.constant 9.99999974E-6 : f32
    %378 = vector.broadcast %cst_79 : f32 to vector<8x1xf32>
    %379 = arith.addf %375, %378 : vector<8x1xf32>
    %380 = math.rsqrt %379 : vector<8x1xf32>
    %381 = vector.broadcast %380 : vector<8x1xf32> to vector<8x128xf32>
    %382 = arith.mulf %377, %381 : vector<8x128xf32>
    %383 = vector.broadcast %30 : vector<1x128xf32> to vector<8x128xf32>
    %384 = arith.mulf %382, %383 : vector<8x128xf32>
    %385 = vector.broadcast %31 : vector<1x128xf32> to vector<8x128xf32>
    %386 = arith.addf %384, %385 : vector<8x128xf32>
    %387 = arith.addf %361, %386 : vector<8x128xf32>
    %388 = arith.negf %387 : vector<8x128xf32>
    %389 = math.exp %388 : vector<8x128xf32>
    %cst_80 = arith.constant 1.000000e+00 : f32
    %390 = vector.broadcast %cst_80 : f32 to vector<8x128xf32>
    %391 = arith.addf %390, %389 : vector<8x128xf32>
    %392 = arith.divf %390, %391 : vector<8x128xf32>
    %393 = vector.extract_strided_slice %392 {offsets = [0, 0], sizes = [8, 32], strides = [1, 1]} : vector<8x128xf32> to vector<8x32xf32>
    %394 = vector.extract_strided_slice %392 {offsets = [0, 32], sizes = [8, 32], strides = [1, 1]} : vector<8x128xf32> to vector<8x32xf32>
    %395 = vector.extract_strided_slice %392 {offsets = [0, 96], sizes = [8, 32], strides = [1, 1]} : vector<8x128xf32> to vector<8x32xf32>
    %396 = vector.extract_strided_slice %387 {offsets = [0, 64], sizes = [8, 32], strides = [1, 1]} : vector<8x128xf32> to vector<8x32xf32>
    %397 = math.tanh %396 : vector<8x32xf32>
    %398 = arith.mulf %394, %358 : vector<8x32xf32>
    %399 = arith.mulf %393, %397 : vector<8x32xf32>
    %400 = arith.addf %398, %399 : vector<8x32xf32>
    %401 = arith.mulf %400, %400 : vector<8x32xf32>
    %402 = tpu.concatenate %400, %401 in 0 : vector<8x32xf32>, vector<8x32xf32> -> vector<16x32xf32>
    %cst_81 = arith.constant dense<0.000000e+00> : vector<16xf32>
    %403 = vector.multi_reduction <add>, %402, %cst_81 [1] : vector<16x32xf32> to vector<16xf32>
    %404 = vector.shape_cast %403 : vector<16xf32> to vector<16x1xf32>
    %cst_82 = arith.constant 3.200000e+01 : f32
    %405 = vector.broadcast %cst_82 : f32 to vector<16x1xf32>
    %406 = arith.divf %404, %405 : vector<16x1xf32>
    %407 = vector.extract_strided_slice %406 {offsets = [0, 0], sizes = [8, 1], strides = [1, 1]} : vector<16x1xf32> to vector<8x1xf32>
    %408 = vector.extract_strided_slice %406 {offsets = [8, 0], sizes = [8, 1], strides = [1, 1]} : vector<16x1xf32> to vector<8x1xf32>
    %409 = arith.mulf %407, %407 : vector<8x1xf32>
    %410 = arith.subf %408, %409 : vector<8x1xf32>
    %cst_83 = arith.constant 0.000000e+00 : f32
    %411 = vector.broadcast %cst_83 : f32 to vector<8x1xf32>
    %412 = arith.maximumf %410, %411 : vector<8x1xf32>
    %413 = vector.broadcast %407 : vector<8x1xf32> to vector<8x32xf32>
    %414 = arith.subf %400, %413 : vector<8x32xf32>
    %cst_84 = arith.constant 9.99999974E-6 : f32
    %415 = vector.broadcast %cst_84 : f32 to vector<8x1xf32>
    %416 = arith.addf %412, %415 : vector<8x1xf32>
    %417 = math.rsqrt %416 : vector<8x1xf32>
    %418 = vector.broadcast %417 : vector<8x1xf32> to vector<8x32xf32>
    %419 = arith.mulf %414, %418 : vector<8x32xf32>
    %420 = vector.broadcast %32 : vector<1x32xf32> to vector<8x32xf32>
    %421 = arith.mulf %419, %420 : vector<8x32xf32>
    %422 = vector.broadcast %33 : vector<1x32xf32> to vector<8x32xf32>
    %423 = arith.addf %421, %422 : vector<8x32xf32>
    %424 = math.tanh %423 : vector<8x32xf32>
    %425 = arith.mulf %395, %424 : vector<8x32xf32>
    %426 = vector.extract_strided_slice %28 {offsets = [48, 0], sizes = [8, 128], strides = [1, 1]} : vector<64x128xf32> to vector<8x128xf32>
    %427 = arith.truncf %425 : vector<8x32xf32> to vector<8x32xbf16>
    %cst_85 = arith.constant dense<0.000000e+00> : vector<8x128xf32>
    %428 = tpu.matmul %427, %29, %cst_85 {dimension_numbers = #tpu.dot_dimension_numbers<[1], [0], [0], [1], [0, 0, 1, 1], [], []>} : vector<8x32xbf16>, vector<32x128xbf16>, vector<8x128xf32> -> vector<8x128xf32>
    %429 = arith.mulf %428, %428 : vector<8x128xf32>
    %430 = tpu.concatenate %428, %429 in 0 : vector<8x128xf32>, vector<8x128xf32> -> vector<16x128xf32>
    %cst_86 = arith.constant dense<0.000000e+00> : vector<16xf32>
    %431 = vector.multi_reduction <add>, %430, %cst_86 [1] : vector<16x128xf32> to vector<16xf32>
    %432 = vector.shape_cast %431 : vector<16xf32> to vector<16x1xf32>
    %cst_87 = arith.constant 1.280000e+02 : f32
    %433 = vector.broadcast %cst_87 : f32 to vector<16x1xf32>
    %434 = arith.divf %432, %433 : vector<16x1xf32>
    %435 = vector.extract_strided_slice %434 {offsets = [0, 0], sizes = [8, 1], strides = [1, 1]} : vector<16x1xf32> to vector<8x1xf32>
    %436 = vector.extract_strided_slice %434 {offsets = [8, 0], sizes = [8, 1], strides = [1, 1]} : vector<16x1xf32> to vector<8x1xf32>
    %437 = arith.mulf %435, %435 : vector<8x1xf32>
    %438 = arith.subf %436, %437 : vector<8x1xf32>
    %cst_88 = arith.constant 0.000000e+00 : f32
    %439 = vector.broadcast %cst_88 : f32 to vector<8x1xf32>
    %440 = arith.maximumf %438, %439 : vector<8x1xf32>
    %441 = vector.broadcast %435 : vector<8x1xf32> to vector<8x128xf32>
    %442 = arith.subf %428, %441 : vector<8x128xf32>
    %cst_89 = arith.constant 9.99999974E-6 : f32
    %443 = vector.broadcast %cst_89 : f32 to vector<8x1xf32>
    %444 = arith.addf %440, %443 : vector<8x1xf32>
    %445 = math.rsqrt %444 : vector<8x1xf32>
    %446 = vector.broadcast %445 : vector<8x1xf32> to vector<8x128xf32>
    %447 = arith.mulf %442, %446 : vector<8x128xf32>
    %448 = vector.broadcast %30 : vector<1x128xf32> to vector<8x128xf32>
    %449 = arith.mulf %447, %448 : vector<8x128xf32>
    %450 = vector.broadcast %31 : vector<1x128xf32> to vector<8x128xf32>
    %451 = arith.addf %449, %450 : vector<8x128xf32>
    %452 = arith.addf %426, %451 : vector<8x128xf32>
    %453 = arith.negf %452 : vector<8x128xf32>
    %454 = math.exp %453 : vector<8x128xf32>
    %cst_90 = arith.constant 1.000000e+00 : f32
    %455 = vector.broadcast %cst_90 : f32 to vector<8x128xf32>
    %456 = arith.addf %455, %454 : vector<8x128xf32>
    %457 = arith.divf %455, %456 : vector<8x128xf32>
    %458 = vector.extract_strided_slice %457 {offsets = [0, 0], sizes = [8, 32], strides = [1, 1]} : vector<8x128xf32> to vector<8x32xf32>
    %459 = vector.extract_strided_slice %457 {offsets = [0, 32], sizes = [8, 32], strides = [1, 1]} : vector<8x128xf32> to vector<8x32xf32>
    %460 = vector.extract_strided_slice %457 {offsets = [0, 96], sizes = [8, 32], strides = [1, 1]} : vector<8x128xf32> to vector<8x32xf32>
    %461 = vector.extract_strided_slice %452 {offsets = [0, 64], sizes = [8, 32], strides = [1, 1]} : vector<8x128xf32> to vector<8x32xf32>
    %462 = math.tanh %461 : vector<8x32xf32>
    %463 = arith.mulf %459, %423 : vector<8x32xf32>
    %464 = arith.mulf %458, %462 : vector<8x32xf32>
    %465 = arith.addf %463, %464 : vector<8x32xf32>
    %466 = arith.mulf %465, %465 : vector<8x32xf32>
    %467 = tpu.concatenate %465, %466 in 0 : vector<8x32xf32>, vector<8x32xf32> -> vector<16x32xf32>
    %cst_91 = arith.constant dense<0.000000e+00> : vector<16xf32>
    %468 = vector.multi_reduction <add>, %467, %cst_91 [1] : vector<16x32xf32> to vector<16xf32>
    %469 = vector.shape_cast %468 : vector<16xf32> to vector<16x1xf32>
    %cst_92 = arith.constant 3.200000e+01 : f32
    %470 = vector.broadcast %cst_92 : f32 to vector<16x1xf32>
    %471 = arith.divf %469, %470 : vector<16x1xf32>
    %472 = vector.extract_strided_slice %471 {offsets = [0, 0], sizes = [8, 1], strides = [1, 1]} : vector<16x1xf32> to vector<8x1xf32>
    %473 = vector.extract_strided_slice %471 {offsets = [8, 0], sizes = [8, 1], strides = [1, 1]} : vector<16x1xf32> to vector<8x1xf32>
    %474 = arith.mulf %472, %472 : vector<8x1xf32>
    %475 = arith.subf %473, %474 : vector<8x1xf32>
    %cst_93 = arith.constant 0.000000e+00 : f32
    %476 = vector.broadcast %cst_93 : f32 to vector<8x1xf32>
    %477 = arith.maximumf %475, %476 : vector<8x1xf32>
    %478 = vector.broadcast %472 : vector<8x1xf32> to vector<8x32xf32>
    %479 = arith.subf %465, %478 : vector<8x32xf32>
    %cst_94 = arith.constant 9.99999974E-6 : f32
    %480 = vector.broadcast %cst_94 : f32 to vector<8x1xf32>
    %481 = arith.addf %477, %480 : vector<8x1xf32>
    %482 = math.rsqrt %481 : vector<8x1xf32>
    %483 = vector.broadcast %482 : vector<8x1xf32> to vector<8x32xf32>
    %484 = arith.mulf %479, %483 : vector<8x32xf32>
    %485 = vector.broadcast %32 : vector<1x32xf32> to vector<8x32xf32>
    %486 = arith.mulf %484, %485 : vector<8x32xf32>
    %487 = vector.broadcast %33 : vector<1x32xf32> to vector<8x32xf32>
    %488 = arith.addf %486, %487 : vector<8x32xf32>
    %489 = math.tanh %488 : vector<8x32xf32>
    %490 = arith.mulf %460, %489 : vector<8x32xf32>
    %491 = vector.extract_strided_slice %28 {offsets = [56, 0], sizes = [8, 128], strides = [1, 1]} : vector<64x128xf32> to vector<8x128xf32>
    %492 = arith.truncf %490 : vector<8x32xf32> to vector<8x32xbf16>
    %cst_95 = arith.constant dense<0.000000e+00> : vector<8x128xf32>
    %493 = tpu.matmul %492, %29, %cst_95 {dimension_numbers = #tpu.dot_dimension_numbers<[1], [0], [0], [1], [0, 0, 1, 1], [], []>} : vector<8x32xbf16>, vector<32x128xbf16>, vector<8x128xf32> -> vector<8x128xf32>
    %494 = arith.mulf %493, %493 : vector<8x128xf32>
    %495 = tpu.concatenate %493, %494 in 0 : vector<8x128xf32>, vector<8x128xf32> -> vector<16x128xf32>
    %cst_96 = arith.constant dense<0.000000e+00> : vector<16xf32>
    %496 = vector.multi_reduction <add>, %495, %cst_96 [1] : vector<16x128xf32> to vector<16xf32>
    %497 = vector.shape_cast %496 : vector<16xf32> to vector<16x1xf32>
    %cst_97 = arith.constant 1.280000e+02 : f32
    %498 = vector.broadcast %cst_97 : f32 to vector<16x1xf32>
    %499 = arith.divf %497, %498 : vector<16x1xf32>
    %500 = vector.extract_strided_slice %499 {offsets = [0, 0], sizes = [8, 1], strides = [1, 1]} : vector<16x1xf32> to vector<8x1xf32>
    %501 = vector.extract_strided_slice %499 {offsets = [8, 0], sizes = [8, 1], strides = [1, 1]} : vector<16x1xf32> to vector<8x1xf32>
    %502 = arith.mulf %500, %500 : vector<8x1xf32>
    %503 = arith.subf %501, %502 : vector<8x1xf32>
    %cst_98 = arith.constant 0.000000e+00 : f32
    %504 = vector.broadcast %cst_98 : f32 to vector<8x1xf32>
    %505 = arith.maximumf %503, %504 : vector<8x1xf32>
    %506 = vector.broadcast %500 : vector<8x1xf32> to vector<8x128xf32>
    %507 = arith.subf %493, %506 : vector<8x128xf32>
    %cst_99 = arith.constant 9.99999974E-6 : f32
    %508 = vector.broadcast %cst_99 : f32 to vector<8x1xf32>
    %509 = arith.addf %505, %508 : vector<8x1xf32>
    %510 = math.rsqrt %509 : vector<8x1xf32>
    %511 = vector.broadcast %510 : vector<8x1xf32> to vector<8x128xf32>
    %512 = arith.mulf %507, %511 : vector<8x128xf32>
    %513 = vector.broadcast %30 : vector<1x128xf32> to vector<8x128xf32>
    %514 = arith.mulf %512, %513 : vector<8x128xf32>
    %515 = vector.broadcast %31 : vector<1x128xf32> to vector<8x128xf32>
    %516 = arith.addf %514, %515 : vector<8x128xf32>
    %517 = arith.addf %491, %516 : vector<8x128xf32>
    %518 = arith.negf %517 : vector<8x128xf32>
    %519 = math.exp %518 : vector<8x128xf32>
    %cst_100 = arith.constant 1.000000e+00 : f32
    %520 = vector.broadcast %cst_100 : f32 to vector<8x128xf32>
    %521 = arith.addf %520, %519 : vector<8x128xf32>
    %522 = arith.divf %520, %521 : vector<8x128xf32>
    %523 = vector.extract_strided_slice %522 {offsets = [0, 0], sizes = [8, 32], strides = [1, 1]} : vector<8x128xf32> to vector<8x32xf32>
    %524 = vector.extract_strided_slice %522 {offsets = [0, 32], sizes = [8, 32], strides = [1, 1]} : vector<8x128xf32> to vector<8x32xf32>
    %525 = vector.extract_strided_slice %522 {offsets = [0, 96], sizes = [8, 32], strides = [1, 1]} : vector<8x128xf32> to vector<8x32xf32>
    %526 = vector.extract_strided_slice %517 {offsets = [0, 64], sizes = [8, 32], strides = [1, 1]} : vector<8x128xf32> to vector<8x32xf32>
    %527 = math.tanh %526 : vector<8x32xf32>
    %528 = arith.mulf %524, %488 : vector<8x32xf32>
    %529 = arith.mulf %523, %527 : vector<8x32xf32>
    %530 = arith.addf %528, %529 : vector<8x32xf32>
    %531 = arith.mulf %530, %530 : vector<8x32xf32>
    %532 = tpu.concatenate %530, %531 in 0 : vector<8x32xf32>, vector<8x32xf32> -> vector<16x32xf32>
    %cst_101 = arith.constant dense<0.000000e+00> : vector<16xf32>
    %533 = vector.multi_reduction <add>, %532, %cst_101 [1] : vector<16x32xf32> to vector<16xf32>
    %534 = vector.shape_cast %533 : vector<16xf32> to vector<16x1xf32>
    %cst_102 = arith.constant 3.200000e+01 : f32
    %535 = vector.broadcast %cst_102 : f32 to vector<16x1xf32>
    %536 = arith.divf %534, %535 : vector<16x1xf32>
    %537 = vector.extract_strided_slice %536 {offsets = [0, 0], sizes = [8, 1], strides = [1, 1]} : vector<16x1xf32> to vector<8x1xf32>
    %538 = vector.extract_strided_slice %536 {offsets = [8, 0], sizes = [8, 1], strides = [1, 1]} : vector<16x1xf32> to vector<8x1xf32>
    %539 = arith.mulf %537, %537 : vector<8x1xf32>
    %540 = arith.subf %538, %539 : vector<8x1xf32>
    %cst_103 = arith.constant 0.000000e+00 : f32
    %541 = vector.broadcast %cst_103 : f32 to vector<8x1xf32>
    %542 = arith.maximumf %540, %541 : vector<8x1xf32>
    %543 = vector.broadcast %537 : vector<8x1xf32> to vector<8x32xf32>
    %544 = arith.subf %530, %543 : vector<8x32xf32>
    %cst_104 = arith.constant 9.99999974E-6 : f32
    %545 = vector.broadcast %cst_104 : f32 to vector<8x1xf32>
    %546 = arith.addf %542, %545 : vector<8x1xf32>
    %547 = math.rsqrt %546 : vector<8x1xf32>
    %548 = vector.broadcast %547 : vector<8x1xf32> to vector<8x32xf32>
    %549 = arith.mulf %544, %548 : vector<8x32xf32>
    %550 = vector.broadcast %32 : vector<1x32xf32> to vector<8x32xf32>
    %551 = arith.mulf %549, %550 : vector<8x32xf32>
    %552 = vector.broadcast %33 : vector<1x32xf32> to vector<8x32xf32>
    %553 = arith.addf %551, %552 : vector<8x32xf32>
    %554 = math.tanh %553 : vector<8x32xf32>
    %555 = arith.mulf %525, %554 : vector<8x32xf32>
    %556 = tpu.concatenate %100, %165, %230, %295, %360, %425, %490, %555 in 1 : vector<8x32xf32>, vector<8x32xf32>, vector<8x32xf32>, vector<8x32xf32>, vector<8x32xf32>, vector<8x32xf32>, vector<8x32xf32>, vector<8x32xf32> -> vector<8x256xf32>
    %c0_105 = arith.constant 0 : index
    %c0_106 = arith.constant 0 : index
    %557 = vector.load %arg11[%c0_105, %c0_106] : memref<8x256xf32, #tpu.memory_space<vmem>>, vector<8x256xf32>
    tpu.vector_store %arg11[%c0_105, %c0_106], %556 {strides = array<i32>} : memref<8x256xf32, #tpu.memory_space<vmem>>, vector<8x256xf32>,
    %c0_107 = arith.constant 0 : index
    %c0_108 = arith.constant 0 : index
    %558 = vector.load %arg12[%c0_107, %c0_108] : memref<8x32xf32, #tpu.memory_space<vmem>>, vector<8x32xf32>
    tpu.vector_store %arg12[%c0_107, %c0_108], %555 {strides = array<i32>} : memref<8x32xf32, #tpu.memory_space<vmem>>, vector<8x32xf32>,
    %c0_109 = arith.constant 0 : index
    %c0_110 = arith.constant 0 : index
    %559 = vector.load %arg13[%c0_109, %c0_110] : memref<8x32xf32, #tpu.memory_space<vmem>>, vector<8x32xf32>
    tpu.vector_store %arg13[%c0_109, %c0_110], %553 {strides = array<i32>} : memref<8x32xf32, #tpu.memory_space<vmem>>, vector<8x32xf32>,
    return
  }
}

</mosaic_0001>

<llo_original>
// kernel: tpu_custom_call.1
$region0: #{tpu_custom_call.1}
  #allocation0 [shape = 'u32[]', space=smem, size = 0x4, offset = 0x4, fixed_abs, tag = 'smem constant byte address 0x4 - core index']
  #allocation1 [shape = 'u32[72,128]{1,0:T(1,128)}', space=vmem, size = 0x9000, scoped, tag = 'internal scratch']
  %s0 = inlined_call_operand.vmem [shape: f32[64,16], index: 0, kind: input, shape index: {}]
  %s1 = inlined_call_operand.vmem [shape: f32[8,32], index: 1, kind: input, shape index: {}]
  %s2 = inlined_call_operand.vmem [shape: f32[8,32], index: 2, kind: input, shape index: {}]
  %s3 = inlined_call_operand.vmem [shape: bf16[16,128], index: 3, kind: input, shape index: {}]
  %s4 = inlined_call_operand.vmem [shape: bf16[32,128], index: 4, kind: input, shape index: {}]
  %s5 = inlined_call_operand.vmem [shape: f32[1,128], index: 5, kind: input, shape index: {}]
  %s6 = inlined_call_operand.vmem [shape: f32[1,128], index: 6, kind: input, shape index: {}]
  %s7 = inlined_call_operand.vmem [shape: f32[1,128], index: 7, kind: input, shape index: {}]
  %s8 = inlined_call_operand.vmem [shape: f32[1,128], index: 8, kind: input, shape index: {}]
  %s9 = inlined_call_operand.vmem [shape: f32[1,32], index: 9, kind: input, shape index: {}]
  %s10 = inlined_call_operand.vmem [shape: f32[1,32], index: 10, kind: input, shape index: {}]
  %s11 = inlined_call_operand.hbm [shape: f32[8,256], index: 11, kind: output, shape index: {0}]
  %s12 = inlined_call_operand.hbm [shape: f32[8,32], index: 12, kind: output, shape index: {1}]
  %s13 = inlined_call_operand.hbm [shape: f32[8,32], index: 13, kind: output, shape index: {2}]
  %14 = xla_tuple %s11, %s12, %s13
  %s15 = sld [smem:[#allocation0]]
  $region70: #{tpu_custom_call.1} parent=0
    _
  %s17 = ssub.s32 1, %s15
  %s18 = scalar_select 0, %s17, %s15
  $region1: #{tpu_custom_call.1} parent=0
    #allocation2 [shape = 'u8[8192]{0}', space=vmem, size = 0x2000, scoped, tag = 'output window, operand 0, single buffered']
    #allocation3 [shape = 's32[1]{0}', space=sflag, size = 0x4, scoped, tag = 'scoped memory for tpu_custom_call.1']
    #allocation4 [shape = 'u8[4096]{0}', space=vmem, size = 0x1000, scoped, tag = 'output window, operand 1, single buffered']
    #allocation5 [shape = 's32[1]{0}', space=sflag, size = 0x4, scoped, tag = 'scoped memory for tpu_custom_call.1']
    #allocation6 [shape = 'u8[4096]{0}', space=vmem, size = 0x1000, scoped, tag = 'output window, operand 2, single buffered']
    %19 = vsyncpa [#allocation3], 0
    %20 = vsyncpa [#allocation5], 0
    // Predicated region
    $region2: #{tpu_custom_call.1} parent=1 // pred_check
      _
    $region3: #{tpu_custom_call.1} parent=1 // pred_check_branch
      %22 = sbr.rel (0) target = $region5
    $region4: #{tpu_custom_call.1} parent=1 // pred_region
      _
    $region5: #{tpu_custom_call.1} parent=1 // pred_fallthru
      _
    // Predicated region
    $region6: #{tpu_custom_call.1} parent=1 // pred_check
      _
    $region7: #{tpu_custom_call.1} parent=1 // pred_check_branch
      %24 = sbr.rel (0) target = $region9
    $region8: #{tpu_custom_call.1} parent=1 // pred_region
      _
    $region9: #{tpu_custom_call.1} parent=1 // pred_fallthru
      _
    // Predicated region
    $region10: #{tpu_custom_call.1} parent=1 // pred_check
      _
    $region11: #{tpu_custom_call.1} parent=1 // pred_check_branch
      %26 = sbr.rel (0) target = $region13
    $region12: #{tpu_custom_call.1} parent=1 // pred_region
      _
    $region13: #{tpu_custom_call.1} parent=1 // pred_fallthru
      _
    // Predicated region
    $region14: #{tpu_custom_call.1} parent=1 // pred_check
      _
    $region15: #{tpu_custom_call.1} parent=1 // pred_check_branch
      %28 = sbr.rel (0) target = $region17
    $region16: #{tpu_custom_call.1} parent=1 // pred_region
      _
    $region17: #{tpu_custom_call.1} parent=1 // pred_fallthru
      _
    // Predicated region
    $region18: #{tpu_custom_call.1} parent=1 // pred_check
      _
    $region19: #{tpu_custom_call.1} parent=1 // pred_check_branch
      %30 = sbr.rel (0) target = $region21
    $region20: #{tpu_custom_call.1} parent=1 // pred_region
      _
    $region21: #{tpu_custom_call.1} parent=1 // pred_fallthru
      _
    // Predicated region
    $region22: #{tpu_custom_call.1} parent=1 // pred_check
      _
    $region23: #{tpu_custom_call.1} parent=1 // pred_check_branch
      %32 = sbr.rel (0) target = $region25
    $region24: #{tpu_custom_call.1} parent=1 // pred_region
      _
    $region25: #{tpu_custom_call.1} parent=1 // pred_fallthru
      _
    // Predicated region
    $region26: #{tpu_custom_call.1} parent=1 // pred_check
      _
    $region27: #{tpu_custom_call.1} parent=1 // pred_check_branch
      %34 = sbr.rel (0) target = $region29
    $region28: #{tpu_custom_call.1} parent=1 // pred_region
      _
    $region29: #{tpu_custom_call.1} parent=1 // pred_fallthru
      _
    // Predicated region
    $region30: #{tpu_custom_call.1} parent=1 // pred_check
      _
    $region31: #{tpu_custom_call.1} parent=1 // pred_check_branch
      %36 = sbr.rel (0) target = $region33
    $region32: #{tpu_custom_call.1} parent=1 // pred_region
      _
    $region33: #{tpu_custom_call.1} parent=1 // pred_fallthru
      _
    // Predicated region
    $region34: #{tpu_custom_call.1} parent=1 // pred_check
      _
    $region35: #{tpu_custom_call.1} parent=1 // pred_check_branch
      %38 = sbr.rel (0) target = $region37
    $region36: #{tpu_custom_call.1} parent=1 // pred_region
      _
    $region37: #{tpu_custom_call.1} parent=1 // pred_fallthru
      _
    // Predicated region
    $region38: #{tpu_custom_call.1} parent=1 // pred_check
      _
    $region39: #{tpu_custom_call.1} parent=1 // pred_check_branch
      %40 = sbr.rel (0) target = $region41
    $region40: #{tpu_custom_call.1} parent=1 // pred_region
      _
    $region41: #{tpu_custom_call.1} parent=1 // pred_fallthru
      _
    // Predicated region
    $region42: #{tpu_custom_call.1} parent=1 // pred_check
      _
    $region43: #{tpu_custom_call.1} parent=1 // pred_check_branch
      %42 = sbr.rel (0) target = $region45
    $region44: #{tpu_custom_call.1} parent=1 // pred_region
      _
    $region45: #{tpu_custom_call.1} parent=1 // pred_fallthru
      _
    %v44 = vld [vmem:[%s0] sm:$0xff]
    %v45 = vld [vmem:[%s0 + $0x8] sm:$0xff]
    %v46 = vld [vmem:[%s0 + $0x10] sm:$0xff]
    %v47 = vld [vmem:[%s0 + $0x18] sm:$0xff]
    %v48 = vld [vmem:[%s0 + $0x20] sm:$0xff]
    %v49 = vld [vmem:[%s0 + $0x28] sm:$0xff]
    %v50 = vld [vmem:[%s0 + $0x30] sm:$0xff]
    %v51 = vld [vmem:[%s0 + $0x38] sm:$0xff]
    %v52 = vpack.c.bf16 %v45, %v44
    %v53 = vpack.c.bf16 %v47, %v46
    %v54 = vpack.c.bf16 %v49, %v48
    %v55 = vpack.c.bf16 %v51, %v50
    %v56 = vld [vmem:[%s3] sm:$0xf]
    %v57 = vld [vmem:[%s3 + $0x4] sm:$0xf]
    %v60 = vunpack.c.l.b16 %v56
    %v61 = vunpack.c.l.b16 %v57
    %v62 = vpack.c.b16 %v61, %v60
    %vm64 = vcmask 130048
    %v66 = vsel %vm64, %v52, 0
    %v69 = vsel %vm64, %v53, 0
    %v72 = vsel %vm64, %v54, 0
    %v75 = vsel %vm64, %v55, 0
    %77 = vmatpush.bf16.msra.mxu0 0
    %78 = vmatpush.bf16.msra.mxu0 0
    %79 = vmatpush.bf16.msra.mxu0 0
    %80 = vmatpush.bf16.msra.mxu0 0
    %81 = vmatpush.bf16.msra.mxu0 0
    %82 = vmatpush.bf16.msra.mxu0 0
    %83 = vmatpush.bf16.msra.mxu0 0
    %84 = vmatpush.bf16.msra.mxu0 %v62
    %85 = vmatmul.bf16.gmra.mxu0 %v66
    %v86 = vpop.f32.mrf.mxu0
    %v87 = vadd.f32 0.0, %v86
    %v88 = vpop.f32.mrf.mxu0
    %v89 = vadd.f32 0.0, %v88
    %90 = vmatmul.bf16.gmra.mxu0 %v69
    %v91 = vpop.f32.mrf.mxu0
    %v92 = vadd.f32 0.0, %v91
    %v93 = vpop.f32.mrf.mxu0
    %v94 = vadd.f32 0.0, %v93
    %95 = vmatmul.bf16.gmra.mxu0 %v72
    %v96 = vpop.f32.mrf.mxu0
    %v97 = vadd.f32 0.0, %v96
    %v98 = vpop.f32.mrf.mxu0
    %v99 = vadd.f32 0.0, %v98
    %100 = vmatmul.bf16.gmra.mxu0 %v75
    %v101 = vpop.f32.mrf.mxu0
    %v102 = vadd.f32 0.0, %v101
    %v103 = vpop.f32.mrf.mxu0
    %v104 = vadd.f32 0.0, %v103
    %105 = vdwg.mxu0
    %v106 = vld [vmem:[%s5] sm:$0x1]
    %v107 = vld [vmem:[%s6] sm:$0x1]
    %v108 = vmul.f32 %v87, %v87
    %v109 = vmul.f32 %v89, %v89
    %v110 = vmul.f32 %v92, %v92
    %v111 = vmul.f32 %v94, %v94
    %v112 = vmul.f32 %v97, %v97
    %v113 = vmul.f32 %v99, %v99
    %v114 = vmul.f32 %v102, %v102
    %v115 = vmul.f32 %v104, %v104
    %116 = vadd.xlane.f32.xlu0 %v87
    %v117 = vpop.xlane.xlu0 %116
    %118 = vadd.xlane.f32.xlu0 %v89
    %v119 = vpop.xlane.xlu0 %118
    %120 = vadd.xlane.f32.xlu0 %v92
    %v121 = vpop.xlane.xlu0 %120
    %122 = vadd.xlane.f32.xlu0 %v94
    %v123 = vpop.xlane.xlu0 %122
    %124 = vadd.xlane.f32.xlu0 %v97
    %v125 = vpop.xlane.xlu0 %124
    %126 = vadd.xlane.f32.xlu0 %v99
    %v127 = vpop.xlane.xlu0 %126
    %128 = vadd.xlane.f32.xlu0 %v102
    %v129 = vpop.xlane.xlu0 %128
    %130 = vadd.xlane.f32.xlu0 %v104
    %v131 = vpop.xlane.xlu0 %130
    %132 = vadd.xlane.f32.xlu0 %v108
    %v133 = vpop.xlane.xlu0 %132
    %134 = vadd.xlane.f32.xlu0 %v109
    %v135 = vpop.xlane.xlu0 %134
    %136 = vadd.xlane.f32.xlu0 %v110
    %v137 = vpop.xlane.xlu0 %136
    %138 = vadd.xlane.f32.xlu0 %v111
    %v139 = vpop.xlane.xlu0 %138
    %140 = vadd.xlane.f32.xlu0 %v112
    %v141 = vpop.xlane.xlu0 %140
    %142 = vadd.xlane.f32.xlu0 %v113
    %v143 = vpop.xlane.xlu0 %142
    %144 = vadd.xlane.f32.xlu0 %v114
    %v145 = vpop.xlane.xlu0 %144
    %146 = vadd.xlane.f32.xlu0 %v115
    %v147 = vpop.xlane.xlu0 %146
    %v148 = vrcp.pop 128.0
    %v149 = vmul.f32 128.0, %v148
    %v150 = vsub.f32 1.0, %v149
    %v151 = vmul.f32 %v148, %v150
    %v152 = vadd.f32 %v148, %v151
    %vm153 = vweird.f32 %v148
    %v154 = vsel %vm153, %v148, %v152
    %v155 = vmul.f32 %v117, %v154
    %v156 = vmul.f32 %v119, %v154
    %v157 = vmul.f32 %v121, %v154
    %v158 = vmul.f32 %v123, %v154
    %v159 = vmul.f32 %v125, %v154
    %v160 = vmul.f32 %v127, %v154
    %v161 = vmul.f32 %v129, %v154
    %v162 = vmul.f32 %v131, %v154
    %v163 = vmul.f32 %v133, %v154
    %v164 = vmul.f32 %v135, %v154
    %v165 = vmul.f32 %v137, %v154
    %v166 = vmul.f32 %v139, %v154
    %v167 = vmul.f32 %v141, %v154
    %v168 = vmul.f32 %v143, %v154
    %v169 = vmul.f32 %v145, %v154
    %v170 = vmul.f32 %v147, %v154
    %v171 = vmul.f32 %v155, %v155
    %v172 = vmul.f32 %v156, %v156
    %v173 = vmul.f32 %v157, %v157
    %v174 = vmul.f32 %v158, %v158
    %v175 = vmul.f32 %v159, %v159
    %v176 = vmul.f32 %v160, %v160
    %v177 = vmul.f32 %v161, %v161
    %v178 = vmul.f32 %v162, %v162
    %v179 = vsub.f32 %v163, %v171
    %v180 = vsub.f32 %v164, %v172
    %v181 = vsub.f32 %v165, %v173
    %v182 = vsub.f32 %v166, %v174
    %v183 = vsub.f32 %v167, %v175
    %v184 = vsub.f32 %v168, %v176
    %v185 = vsub.f32 %v169, %v177
    %v186 = vsub.f32 %v170, %v178
    %v187 = vmax.f32 %v179, 0.0
    %v188 = vmax.f32 %v180, 0.0
    %v189 = vmax.f32 %v181, 0.0
    %v190 = vmax.f32 %v182, 0.0
    %v191 = vmax.f32 %v183, 0.0
    %v192 = vmax.f32 %v184, 0.0
    %v193 = vmax.f32 %v185, 0.0
    %v194 = vmax.f32 %v186, 0.0
    %v195 = vsub.f32 %v87, %v155
    %v196 = vsub.f32 %v89, %v156
    %v197 = vsub.f32 %v92, %v157
    %v198 = vsub.f32 %v94, %v158
    %v199 = vsub.f32 %v97, %v159
    %v200 = vsub.f32 %v99, %v160
    %v201 = vsub.f32 %v102, %v161
    %v202 = vsub.f32 %v104, %v162
    %v203 = vadd.f32 %v187, 1e-05
    %v204 = vadd.f32 %v188, 1e-05
    %v205 = vadd.f32 %v189, 1e-05
    %v206 = vadd.f32 %v190, 1e-05
    %v207 = vadd.f32 %v191, 1e-05
    %v208 = vadd.f32 %v192, 1e-05
    %v209 = vadd.f32 %v193, 1e-05
    %v210 = vadd.f32 %v194, 1e-05
    %v211 = vrsqrt.pop %v203
    %v212 = vmul.f32 %v211, %v203
    %v213 = vmul.f32 %v212, %v211
    %v214 = vmul.f32 0.5, %v213
    %v215 = vsub.f32 1.5, %v214
    %v216 = vmul.f32 %v211, %v215
    %vm217 = vweird.f32 %v203
    %vm218 = vweird.f32 %v211
    %vm219 = vmor %vm217, %vm218
    %v220 = vsel %vm219, %v211, %v216
    %v221 = vrsqrt.pop %v204
    %v222 = vmul.f32 %v221, %v204
    %v223 = vmul.f32 %v222, %v221
    %v224 = vmul.f32 0.5, %v223
    %v225 = vsub.f32 1.5, %v224
    %v226 = vmul.f32 %v221, %v225
    %vm227 = vweird.f32 %v204
    %vm228 = vweird.f32 %v221
    %vm229 = vmor %vm227, %vm228
    %v230 = vsel %vm229, %v221, %v226
    %v231 = vrsqrt.pop %v205
    %v232 = vmul.f32 %v231, %v205
    %v233 = vmul.f32 %v232, %v231
    %v234 = vmul.f32 0.5, %v233
    %v235 = vsub.f32 1.5, %v234
    %v236 = vmul.f32 %v231, %v235
    %vm237 = vweird.f32 %v205
    %vm238 = vweird.f32 %v231
    %vm239 = vmor %vm237, %vm238
    %v240 = vsel %vm239, %v231, %v236
    %v241 = vrsqrt.pop %v206
    %v242 = vmul.f32 %v241, %v206
    %v243 = vmul.f32 %v242, %v241
    %v244 = vmul.f32 0.5, %v243
    %v245 = vsub.f32 1.5, %v244
    %v246 = vmul.f32 %v241, %v245
    %vm247 = vweird.f32 %v206
    %vm248 = vweird.f32 %v241
    %vm249 = vmor %vm247, %vm248
    %v250 = vsel %vm249, %v241, %v246
    %v251 = vrsqrt.pop %v207
    %v252 = vmul.f32 %v251, %v207
    %v253 = vmul.f32 %v252, %v251
    %v254 = vmul.f32 0.5, %v253
    %v255 = vsub.f32 1.5, %v254
    %v256 = vmul.f32 %v251, %v255
    %vm257 = vweird.f32 %v207
    %vm258 = vweird.f32 %v251
    %vm259 = vmor %vm257, %vm258
    %v260 = vsel %vm259, %v251, %v256
    %v261 = vrsqrt.pop %v208
    %v262 = vmul.f32 %v261, %v208
    %v263 = vmul.f32 %v262, %v261
    %v264 = vmul.f32 0.5, %v263
    %v265 = vsub.f32 1.5, %v264
    %v266 = vmul.f32 %v261, %v265
    %vm267 = vweird.f32 %v208
    %vm268 = vweird.f32 %v261
    %vm269 = vmor %vm267, %vm268
    %v270 = vsel %vm269, %v261, %v266
    %v271 = vrsqrt.pop %v209
    %v272 = vmul.f32 %v271, %v209
    %v273 = vmul.f32 %v272, %v271
    %v274 = vmul.f32 0.5, %v273
    %v275 = vsub.f32 1.5, %v274
    %v276 = vmul.f32 %v271, %v275
    %vm277 = vweird.f32 %v209
    %vm278 = vweird.f32 %v271
    %vm279 = vmor %vm277, %vm278
    %v280 = vsel %vm279, %v271, %v276
    %v281 = vrsqrt.pop %v210
    %v282 = vmul.f32 %v281, %v210
    %v283 = vmul.f32 %v282, %v281
    %v284 = vmul.f32 0.5, %v283
    %v285 = vsub.f32 1.5, %v284
    %v286 = vmul.f32 %v281, %v285
    %vm287 = vweird.f32 %v210
    %vm288 = vweird.f32 %v281
    %vm289 = vmor %vm287, %vm288
    %v290 = vsel %vm289, %v281, %v286
    %v291 = vmul.f32 %v195, %v220
    %v292 = vmul.f32 %v196, %v230
    %v293 = vmul.f32 %v197, %v240
    %v294 = vmul.f32 %v198, %v250
    %v295 = vmul.f32 %v199, %v260
    %v296 = vmul.f32 %v200, %v270
    %v297 = vmul.f32 %v201, %v280
    %v298 = vmul.f32 %v202, %v290
    %v300 = vperm.slane %v106, 0
    %v302 = vmul.f32 %v291, %v300
    %v303 = vmul.f32 %v292, %v300
    %v304 = vmul.f32 %v293, %v300
    %v305 = vmul.f32 %v294, %v300
    %v306 = vmul.f32 %v295, %v300
    %v307 = vmul.f32 %v296, %v300
    %v308 = vmul.f32 %v297, %v300
    %v309 = vmul.f32 %v298, %v300
    %v311 = vperm.slane %v107, 0
    %v313 = vadd.f32 %v302, %v311
    %v314 = vadd.f32 %v303, %v311
    %v315 = vadd.f32 %v304, %v311
    %v316 = vadd.f32 %v305, %v311
    %v317 = vadd.f32 %v306, %v311
    %v318 = vadd.f32 %v307, %v311
    %v319 = vadd.f32 %v308, %v311
    %v320 = vadd.f32 %v309, %v311
    %v321 = vld [vmem:[%s4] sm:$0xf]
    %v322 = vld [vmem:[%s4 + $0x4] sm:$0xf]
    %v323 = vld [vmem:[%s4 + $0x8] sm:$0xf]
    %v324 = vld [vmem:[%s4 + $0xc] sm:$0xf]
    %v325 = vld [vmem:[%s7] sm:$0x1]
    %v326 = vld [vmem:[%s8] sm:$0x1]
    %v327 = vld [vmem:[%s9] sm:$0x1]
    %v328 = vld [vmem:[%s10] sm:$0x1]
    %v329 = vld [vmem:[%s1] sm:$0xff]
    %v330 = vld [vmem:[%s2] sm:$0xff]
    %v331 = vpack.c.bf16 %v329, %v329
    %v336 = vunpack.c.l.b16 %v321
    %v337 = vunpack.c.l.b16 %v322
    %v338 = vunpack.c.l.b16 %v323
    %v339 = vunpack.c.l.b16 %v324
    %v340 = vpack.c.b16 %v337, %v336
    %v341 = vpack.c.b16 %v339, %v338
    %vm344 = vcmask 261120
    %v346 = vsel %vm344, %v331, 0
    %348 = vmatpush.bf16.msra.mxu0 0
    %349 = vmatpush.bf16.msra.mxu0 0
    %350 = vmatpush.bf16.msra.mxu0 0
    %351 = vmatpush.bf16.msra.mxu0 0
    %352 = vmatpush.bf16.msra.mxu0 0
    %353 = vmatpush.bf16.msra.mxu0 0
    %354 = vmatpush.bf16.msra.mxu0 %v341
    %355 = vmatpush.bf16.msra.mxu0 %v340
    %356 = vmatmul.bf16.gmra.mxu0 %v346
    %v357 = vpop.f32.mrf.mxu0
    %v358 = vadd.f32 0.0, %v357
    %v359 = vpop.f32.mrf.mxu0
    %360 = vdwg.mxu0
    %v361 = vmul.f32 %v358, %v358
    %362 = vadd.xlane.f32.xlu0 %v358
    %v363 = vpop.xlane.xlu0 %362
    %364 = vadd.xlane.f32.xlu0 %v361
    %v365 = vpop.xlane.xlu0 %364
    %v366 = vmul.f32 %v363, %v154
    %v367 = vmul.f32 %v365, %v154
    %v368 = vmul.f32 %v366, %v366
    %v369 = vsub.f32 %v367, %v368
    %v370 = vmax.f32 %v369, 0.0
    %v371 = vsub.f32 %v358, %v366
    %v372 = vadd.f32 %v370, 1e-05
    %v373 = vrsqrt.pop %v372
    %v374 = vmul.f32 %v373, %v372
    %v375 = vmul.f32 %v374, %v373
    %v376 = vmul.f32 0.5, %v375
    %v377 = vsub.f32 1.5, %v376
    %v378 = vmul.f32 %v373, %v377
    %vm379 = vweird.f32 %v372
    %vm380 = vweird.f32 %v373
    %vm381 = vmor %vm379, %vm380
    %v382 = vsel %vm381, %v373, %v378
    %v383 = vmul.f32 %v371, %v382
    %v385 = vperm.slane %v325, 0
    %v387 = vmul.f32 %v383, %v385
    %v389 = vperm.slane %v326, 0
    %v391 = vadd.f32 %v387, %v389
    %v392 = vadd.f32 %v313, %v391
    %v393 = vxor.u32 %v392, 2147483648
    %v394 = vmul.f32 %v393, 1.442695
    %v395 = vpow.pop %v394
    %v396 = vadd.f32 %v395, 1.0
    %v397 = vrcp.pop %v396
    %v398 = vmul.f32 %v396, %v397
    %v399 = vsub.f32 1.0, %v398
    %v400 = vmul.f32 %v397, %v399
    %v401 = vadd.f32 %v397, %v400
    %vm402 = vweird.f32 %v396
    %vm403 = vweird.f32 %v397
    %vm404 = vmor %vm402, %vm403
    %v405 = vsel %vm404, %v397, %v401
    %v406 = vand.u32 2147483647, %v396
    %vm407 = vcmp.eq.f32.partialorder %v406, 8.507059e+37
    %v408 = vand.u32 %v396, 2147483648
    %v409 = vor.u32 1.1754944e-38, %v408
    %v410 = vsel %vm407, %v409, %v405
    %v411 = vmul.f32 1.0, %v410
    %v412 = vtanh.pop %v392
    %414 = vrot.lane.b32.xlu0 %v330, 32
    %v415 = vpop.permute.xlu0 %414
    %v417 = vmul.f32 %v411, %v415
    %419 = vrot.lane.b32.xlu0 %v412, 64
    %v420 = vpop.permute.xlu0 %419
    %v422 = vmul.f32 %v411, %v420
    %424 = vrot.lane.b32.xlu0 %v422, 32
    %v425 = vpop.permute.xlu0 %424
    %v427 = vadd.f32 %v417, %v425
    %v428 = vmul.f32 %v427, %v427
    %431 = vrot.lane.b32.xlu0 %v427, 96
    %v432 = vpop.permute.xlu0 %431
    %433 = vrot.lane.b32.xlu0 %v428, 96
    %v434 = vpop.permute.xlu0 %433
    %v437 = vsel %vm344, %v432, 0.0
    %438 = vadd.xlane.f32.xlu0 %v437
    %v439 = vpop.xlane.xlu0 %438
    %v440 = vsel %vm344, %v434, 0.0
    %441 = vadd.xlane.f32.xlu0 %v440
    %v442 = vpop.xlane.xlu0 %441
    %v443 = vrcp.pop 32.0
    %v444 = vmul.f32 32.0, %v443
    %v445 = vsub.f32 1.0, %v444
    %v446 = vmul.f32 %v443, %v445
    %v447 = vadd.f32 %v443, %v446
    %vm448 = vweird.f32 %v443
    %v449 = vsel %vm448, %v443, %v447
    %v450 = vmul.f32 %v439, %v449
    %v451 = vmul.f32 %v442, %v449
    %v452 = vmul.f32 %v450, %v450
    %v453 = vsub.f32 %v451, %v452
    %v454 = vmax.f32 %v453, 0.0
    %v455 = vsub.f32 %v427, %v450
    %v456 = vadd.f32 %v454, 1e-05
    %v457 = vrsqrt.pop %v456
    %v458 = vmul.f32 %v457, %v456
    %v459 = vmul.f32 %v458, %v457
    %v460 = vmul.f32 0.5, %v459
    %v461 = vsub.f32 1.5, %v460
    %v462 = vmul.f32 %v457, %v461
    %vm463 = vweird.f32 %v456
    %vm464 = vweird.f32 %v457
    %vm465 = vmor %vm463, %vm464
    %v466 = vsel %vm465, %v457, %v462
    %v467 = vmul.f32 %v455, %v466
    %v469 = vperm.slane %v327, 0
    %470 = vrot.lane.b32.xlu0 %v469, 32
    %v471 = vpop.permute.xlu0 %470
    %v473 = vmul.f32 %v467, %v471
    %v475 = vperm.slane %v328, 0
    %476 = vrot.lane.b32.xlu0 %v475, 32
    %v477 = vpop.permute.xlu0 %476
    %v479 = vadd.f32 %v473, %v477
    %v480 = vtanh.pop %v479
    %482 = vrot.lane.b32.xlu0 %v480, 64
    %v483 = vpop.permute.xlu0 %482
    %v485 = vmul.f32 %v411, %v483
    %v486 = vpack.c.bf16 %v485, %v485
    %488 = vrot.lane.b32.xlu0 %v486, 32
    %v489 = vpop.permute.xlu0 %488
    %v491 = vsel %vm344, %v489, 0
    %493 = vmatpush.bf16.msra.mxu0 0
    %494 = vmatpush.bf16.msra.mxu0 0
    %495 = vmatpush.bf16.msra.mxu0 0
    %496 = vmatpush.bf16.msra.mxu0 0
    %497 = vmatpush.bf16.msra.mxu0 0
    %498 = vmatpush.bf16.msra.mxu0 0
    %499 = vmatpush.bf16.msra.mxu0 %v341
    %500 = vmatpush.bf16.msra.mxu0 %v340
    %501 = vmatmul.bf16.gmra.mxu0 %v491
    %v502 = vpop.f32.mrf.mxu0
    %v503 = vadd.f32 0.0, %v502
    %v504 = vpop.f32.mrf.mxu0
    %505 = vdwg.mxu0
    %v506 = vmul.f32 %v503, %v503
    %507 = vadd.xlane.f32.xlu0 %v503
    %v508 = vpop.xlane.xlu0 %507
    %509 = vadd.xlane.f32.xlu0 %v506
    %v510 = vpop.xlane.xlu0 %509
    %v511 = vmul.f32 %v508, %v154
    %v512 = vmul.f32 %v510, %v154
    %v513 = vmul.f32 %v511, %v511
    %v514 = vsub.f32 %v512, %v513
    %v515 = vmax.f32 %v514, 0.0
    %v516 = vsub.f32 %v503, %v511
    %v517 = vadd.f32 %v515, 1e-05
    %v518 = vrsqrt.pop %v517
    %v519 = vmul.f32 %v518, %v517
    %v520 = vmul.f32 %v519, %v518
    %v521 = vmul.f32 0.5, %v520
    %v522 = vsub.f32 1.5, %v521
    %v523 = vmul.f32 %v518, %v522
    %vm524 = vweird.f32 %v517
    %vm525 = vweird.f32 %v518
    %vm526 = vmor %vm524, %vm525
    %v527 = vsel %vm526, %v518, %v523
    %v528 = vmul.f32 %v516, %v527
    %v529 = vmul.f32 %v528, %v385
    %v530 = vadd.f32 %v529, %v389
    %v531 = vadd.f32 %v314, %v530
    %v532 = vxor.u32 %v531, 2147483648
    %v533 = vmul.f32 %v532, 1.442695
    %v534 = vpow.pop %v533
    %v535 = vadd.f32 %v534, 1.0
    %v536 = vrcp.pop %v535
    %v537 = vmul.f32 %v535, %v536
    %v538 = vsub.f32 1.0, %v537
    %v539 = vmul.f32 %v536, %v538
    %v540 = vadd.f32 %v536, %v539
    %vm541 = vweird.f32 %v535
    %vm542 = vweird.f32 %v536
    %vm543 = vmor %vm541, %vm542
    %v544 = vsel %vm543, %v536, %v540
    %v545 = vand.u32 2147483647, %v535
    %vm546 = vcmp.eq.f32.partialorder %v545, 8.507059e+37
    %v547 = vand.u32 %v535, 2147483648
    %v548 = vor.u32 1.1754944e-38, %v547
    %v549 = vsel %vm546, %v548, %v544
    %v550 = vmul.f32 1.0, %v549
    %v551 = vtanh.pop %v531
    %v552 = vmul.f32 %v550, %v479
    %554 = vrot.lane.b32.xlu0 %v551, 64
    %v555 = vpop.permute.xlu0 %554
    %v557 = vmul.f32 %v550, %v555
    %559 = vrot.lane.b32.xlu0 %v557, 32
    %v560 = vpop.permute.xlu0 %559
    %v562 = vadd.f32 %v552, %v560
    %v563 = vmul.f32 %v562, %v562
    %566 = vrot.lane.b32.xlu0 %v562, 96
    %v567 = vpop.permute.xlu0 %566
    %568 = vrot.lane.b32.xlu0 %v563, 96
    %v569 = vpop.permute.xlu0 %568
    %v572 = vsel %vm344, %v567, 0.0
    %573 = vadd.xlane.f32.xlu0 %v572
    %v574 = vpop.xlane.xlu0 %573
    %v575 = vsel %vm344, %v569, 0.0
    %576 = vadd.xlane.f32.xlu0 %v575
    %v577 = vpop.xlane.xlu0 %576
    %v578 = vmul.f32 %v574, %v449
    %v579 = vmul.f32 %v577, %v449
    %v580 = vmul.f32 %v578, %v578
    %v581 = vsub.f32 %v579, %v580
    %v582 = vmax.f32 %v581, 0.0
    %v583 = vsub.f32 %v562, %v578
    %v584 = vadd.f32 %v582, 1e-05
    %v585 = vrsqrt.pop %v584
    %v586 = vmul.f32 %v585, %v584
    %v587 = vmul.f32 %v586, %v585
    %v588 = vmul.f32 0.5, %v587
    %v589 = vsub.f32 1.5, %v588
    %v590 = vmul.f32 %v585, %v589
    %vm591 = vweird.f32 %v584
    %vm592 = vweird.f32 %v585
    %vm593 = vmor %vm591, %vm592
    %v594 = vsel %vm593, %v585, %v590
    %v595 = vmul.f32 %v583, %v594
    %v596 = vmul.f32 %v595, %v471
    %v597 = vadd.f32 %v596, %v477
    %v598 = vtanh.pop %v597
    %600 = vrot.lane.b32.xlu0 %v598, 64
    %v601 = vpop.permute.xlu0 %600
    %v603 = vmul.f32 %v550, %v601
    %v604 = vpack.c.bf16 %v603, %v603
    %606 = vrot.lane.b32.xlu0 %v604, 32
    %v607 = vpop.permute.xlu0 %606
    %v609 = vsel %vm344, %v607, 0
    %611 = vmatpush.bf16.msra.mxu0 0
    %612 = vmatpush.bf16.msra.mxu0 0
    %613 = vmatpush.bf16.msra.mxu0 0
    %614 = vmatpush.bf16.msra.mxu0 0
    %615 = vmatpush.bf16.msra.mxu0 0
    %616 = vmatpush.bf16.msra.mxu0 0
    %617 = vmatpush.bf16.msra.mxu0 %v341
    %618 = vmatpush.bf16.msra.mxu0 %v340
    %619 = vmatmul.bf16.gmra.mxu0 %v609
    %v620 = vpop.f32.mrf.mxu0
    %v621 = vadd.f32 0.0, %v620
    %v622 = vpop.f32.mrf.mxu0
    %623 = vdwg.mxu0
    %v624 = vmul.f32 %v621, %v621
    %625 = vadd.xlane.f32.xlu0 %v621
    %v626 = vpop.xlane.xlu0 %625
    %627 = vadd.xlane.f32.xlu0 %v624
    %v628 = vpop.xlane.xlu0 %627
    %v629 = vmul.f32 %v626, %v154
    %v630 = vmul.f32 %v628, %v154
    %v631 = vmul.f32 %v629, %v629
    %v632 = vsub.f32 %v630, %v631
    %v633 = vmax.f32 %v632, 0.0
    %v634 = vsub.f32 %v621, %v629
    %v635 = vadd.f32 %v633, 1e-05
    %v636 = vrsqrt.pop %v635
    %v637 = vmul.f32 %v636, %v635
    %v638 = vmul.f32 %v637, %v636
    %v639 = vmul.f32 0.5, %v638
    %v640 = vsub.f32 1.5, %v639
    %v641 = vmul.f32 %v636, %v640
    %vm642 = vweird.f32 %v635
    %vm643 = vweird.f32 %v636
    %vm644 = vmor %vm642, %vm643
    %v645 = vsel %vm644, %v636, %v641
    %v646 = vmul.f32 %v634, %v645
    %v647 = vmul.f32 %v646, %v385
    %v648 = vadd.f32 %v647, %v389
    %v649 = vadd.f32 %v315, %v648
    %v650 = vxor.u32 %v649, 2147483648
    %v651 = vmul.f32 %v650, 1.442695
    %v652 = vpow.pop %v651
    %v653 = vadd.f32 %v652, 1.0
    %v654 = vrcp.pop %v653
    %v655 = vmul.f32 %v653, %v654
    %v656 = vsub.f32 1.0, %v655
    %v657 = vmul.f32 %v654, %v656
    %v658 = vadd.f32 %v654, %v657
    %vm659 = vweird.f32 %v653
    %vm660 = vweird.f32 %v654
    %vm661 = vmor %vm659, %vm660
    %v662 = vsel %vm661, %v654, %v658
    %v663 = vand.u32 2147483647, %v653
    %vm664 = vcmp.eq.f32.partialorder %v663, 8.507059e+37
    %v665 = vand.u32 %v653, 2147483648
    %v666 = vor.u32 1.1754944e-38, %v665
    %v667 = vsel %vm664, %v666, %v662
    %v668 = vmul.f32 1.0, %v667
    %v669 = vtanh.pop %v649
    %v670 = vmul.f32 %v668, %v597
    %672 = vrot.lane.b32.xlu0 %v669, 64
    %v673 = vpop.permute.xlu0 %672
    %v675 = vmul.f32 %v668, %v673
    %677 = vrot.lane.b32.xlu0 %v675, 32
    %v678 = vpop.permute.xlu0 %677
    %v680 = vadd.f32 %v670, %v678
    %v681 = vmul.f32 %v680, %v680
    %684 = vrot.lane.b32.xlu0 %v680, 96
    %v685 = vpop.permute.xlu0 %684
    %686 = vrot.lane.b32.xlu0 %v681, 96
    %v687 = vpop.permute.xlu0 %686
    %v690 = vsel %vm344, %v685, 0.0
    %691 = vadd.xlane.f32.xlu0 %v690
    %v692 = vpop.xlane.xlu0 %691
    %v693 = vsel %vm344, %v687, 0.0
    %694 = vadd.xlane.f32.xlu0 %v693
    %v695 = vpop.xlane.xlu0 %694
    %v696 = vmul.f32 %v692, %v449
    %v697 = vmul.f32 %v695, %v449
    %v698 = vmul.f32 %v696, %v696
    %v699 = vsub.f32 %v697, %v698
    %v700 = vmax.f32 %v699, 0.0
    %v701 = vsub.f32 %v680, %v696
    %v702 = vadd.f32 %v700, 1e-05
    %v703 = vrsqrt.pop %v702
    %v704 = vmul.f32 %v703, %v702
    %v705 = vmul.f32 %v704, %v703
    %v706 = vmul.f32 0.5, %v705
    %v707 = vsub.f32 1.5, %v706
    %v708 = vmul.f32 %v703, %v707
    %vm709 = vweird.f32 %v702
    %vm710 = vweird.f32 %v703
    %vm711 = vmor %vm709, %vm710
    %v712 = vsel %vm711, %v703, %v708
    %v713 = vmul.f32 %v701, %v712
    %v714 = vmul.f32 %v713, %v471
    %v715 = vadd.f32 %v714, %v477
    %v716 = vtanh.pop %v715
    %718 = vrot.lane.b32.xlu0 %v716, 64
    %v719 = vpop.permute.xlu0 %718
    %v721 = vmul.f32 %v668, %v719
    %v722 = vpack.c.bf16 %v721, %v721
    %724 = vrot.lane.b32.xlu0 %v722, 32
    %v725 = vpop.permute.xlu0 %724
    %v727 = vsel %vm344, %v725, 0
    %729 = vmatpush.bf16.msra.mxu0 0
    %730 = vmatpush.bf16.msra.mxu0 0
    %731 = vmatpush.bf16.msra.mxu0 0
    %732 = vmatpush.bf16.msra.mxu0 0
    %733 = vmatpush.bf16.msra.mxu0 0
    %734 = vmatpush.bf16.msra.mxu0 0
    %735 = vmatpush.bf16.msra.mxu0 %v341
    %736 = vmatpush.bf16.msra.mxu0 %v340
    %737 = vmatmul.bf16.gmra.mxu0 %v727
    %v738 = vpop.f32.mrf.mxu0
    %v739 = vadd.f32 0.0, %v738
    %v740 = vpop.f32.mrf.mxu0
    %741 = vdwg.mxu0
    %v742 = vmul.f32 %v739, %v739
    %743 = vadd.xlane.f32.xlu0 %v739
    %v744 = vpop.xlane.xlu0 %743
    %745 = vadd.xlane.f32.xlu0 %v742
    %v746 = vpop.xlane.xlu0 %745
    %v747 = vmul.f32 %v744, %v154
    %v748 = vmul.f32 %v746, %v154
    %v749 = vmul.f32 %v747, %v747
    %v750 = vsub.f32 %v748, %v749
    %v751 = vmax.f32 %v750, 0.0
    %v752 = vsub.f32 %v739, %v747
    %v753 = vadd.f32 %v751, 1e-05
    %v754 = vrsqrt.pop %v753
    %v755 = vmul.f32 %v754, %v753
    %v756 = vmul.f32 %v755, %v754
    %v757 = vmul.f32 0.5, %v756
    %v758 = vsub.f32 1.5, %v757
    %v759 = vmul.f32 %v754, %v758
    %vm760 = vweird.f32 %v753
    %vm761 = vweird.f32 %v754
    %vm762 = vmor %vm760, %vm761
    %v763 = vsel %vm762, %v754, %v759
    %v764 = vmul.f32 %v752, %v763
    %v765 = vmul.f32 %v764, %v385
    %v766 = vadd.f32 %v765, %v389
    %v767 = vadd.f32 %v316, %v766
    %v768 = vxor.u32 %v767, 2147483648
    %v769 = vmul.f32 %v768, 1.442695
    %v770 = vpow.pop %v769
    %v771 = vadd.f32 %v770, 1.0
    %v772 = vrcp.pop %v771
    %v773 = vmul.f32 %v771, %v772
    %v774 = vsub.f32 1.0, %v773
    %v775 = vmul.f32 %v772, %v774
    %v776 = vadd.f32 %v772, %v775
    %vm777 = vweird.f32 %v771
    %vm778 = vweird.f32 %v772
    %vm779 = vmor %vm777, %vm778
    %v780 = vsel %vm779, %v772, %v776
    %v781 = vand.u32 2147483647, %v771
    %vm782 = vcmp.eq.f32.partialorder %v781, 8.507059e+37
    %v783 = vand.u32 %v771, 2147483648
    %v784 = vor.u32 1.1754944e-38, %v783
    %v785 = vsel %vm782, %v784, %v780
    %v786 = vmul.f32 1.0, %v785
    %v787 = vtanh.pop %v767
    %v788 = vmul.f32 %v786, %v715
    %790 = vrot.lane.b32.xlu0 %v787, 64
    %v791 = vpop.permute.xlu0 %790
    %v793 = vmul.f32 %v786, %v791
    %795 = vrot.lane.b32.xlu0 %v793, 32
    %v796 = vpop.permute.xlu0 %795
    %v798 = vadd.f32 %v788, %v796
    %v799 = vmul.f32 %v798, %v798
    %802 = vrot.lane.b32.xlu0 %v798, 96
    %v803 = vpop.permute.xlu0 %802
    %804 = vrot.lane.b32.xlu0 %v799, 96
    %v805 = vpop.permute.xlu0 %804
    %v808 = vsel %vm344, %v803, 0.0
    %809 = vadd.xlane.f32.xlu0 %v808
    %v810 = vpop.xlane.xlu0 %809
    %v811 = vsel %vm344, %v805, 0.0
    %812 = vadd.xlane.f32.xlu0 %v811
    %v813 = vpop.xlane.xlu0 %812
    %v814 = vmul.f32 %v810, %v449
    %v815 = vmul.f32 %v813, %v449
    %v816 = vmul.f32 %v814, %v814
    %v817 = vsub.f32 %v815, %v816
    %v818 = vmax.f32 %v817, 0.0
    %v819 = vsub.f32 %v798, %v814
    %v820 = vadd.f32 %v818, 1e-05
    %v821 = vrsqrt.pop %v820
    %v822 = vmul.f32 %v821, %v820
    %v823 = vmul.f32 %v822, %v821
    %v824 = vmul.f32 0.5, %v823
    %v825 = vsub.f32 1.5, %v824
    %v826 = vmul.f32 %v821, %v825
    %vm827 = vweird.f32 %v820
    %vm828 = vweird.f32 %v821
    %vm829 = vmor %vm827, %vm828
    %v830 = vsel %vm829, %v821, %v826
    %v831 = vmul.f32 %v819, %v830
    %v832 = vmul.f32 %v831, %v471
    %v833 = vadd.f32 %v832, %v477
    %v834 = vtanh.pop %v833
    %836 = vrot.lane.b32.xlu0 %v834, 64
    %v837 = vpop.permute.xlu0 %836
    %v839 = vmul.f32 %v786, %v837
    %v840 = vpack.c.bf16 %v839, %v839
    %842 = vrot.lane.b32.xlu0 %v840, 32
    %v843 = vpop.permute.xlu0 %842
    %v845 = vsel %vm344, %v843, 0
    %847 = vmatpush.bf16.msra.mxu0 0
    %848 = vmatpush.bf16.msra.mxu0 0
    %849 = vmatpush.bf16.msra.mxu0 0
    %850 = vmatpush.bf16.msra.mxu0 0
    %851 = vmatpush.bf16.msra.mxu0 0
    %852 = vmatpush.bf16.msra.mxu0 0
    %853 = vmatpush.bf16.msra.mxu0 %v341
    %854 = vmatpush.bf16.msra.mxu0 %v340
    %855 = vmatmul.bf16.gmra.mxu0 %v845
    %v856 = vpop.f32.mrf.mxu0
    %v857 = vadd.f32 0.0, %v856
    %v858 = vpop.f32.mrf.mxu0
    %859 = vdwg.mxu0
    %v860 = vmul.f32 %v857, %v857
    %861 = vadd.xlane.f32.xlu0 %v857
    %v862 = vpop.xlane.xlu0 %861
    %863 = vadd.xlane.f32.xlu0 %v860
    %v864 = vpop.xlane.xlu0 %863
    %v865 = vmul.f32 %v862, %v154
    %v866 = vmul.f32 %v864, %v154
    %v867 = vmul.f32 %v865, %v865
    %v868 = vsub.f32 %v866, %v867
    %v869 = vmax.f32 %v868, 0.0
    %v870 = vsub.f32 %v857, %v865
    %v871 = vadd.f32 %v869, 1e-05
    %v872 = vrsqrt.pop %v871
    %v873 = vmul.f32 %v872, %v871
    %v874 = vmul.f32 %v873, %v872
    %v875 = vmul.f32 0.5, %v874
    %v876 = vsub.f32 1.5, %v875
    %v877 = vmul.f32 %v872, %v876
    %vm878 = vweird.f32 %v871
    %vm879 = vweird.f32 %v872
    %vm880 = vmor %vm878, %vm879
    %v881 = vsel %vm880, %v872, %v877
    %v882 = vmul.f32 %v870, %v881
    %v883 = vmul.f32 %v882, %v385
    %v884 = vadd.f32 %v883, %v389
    %v885 = vadd.f32 %v317, %v884
    %v886 = vxor.u32 %v885, 2147483648
    %v887 = vmul.f32 %v886, 1.442695
    %v888 = vpow.pop %v887
    %v889 = vadd.f32 %v888, 1.0
    %v890 = vrcp.pop %v889
    %v891 = vmul.f32 %v889, %v890
    %v892 = vsub.f32 1.0, %v891
    %v893 = vmul.f32 %v890, %v892
    %v894 = vadd.f32 %v890, %v893
    %vm895 = vweird.f32 %v889
    %vm896 = vweird.f32 %v890
    %vm897 = vmor %vm895, %vm896
    %v898 = vsel %vm897, %v890, %v894
    %v899 = vand.u32 2147483647, %v889
    %vm900 = vcmp.eq.f32.partialorder %v899, 8.507059e+37
    %v901 = vand.u32 %v889, 2147483648
    %v902 = vor.u32 1.1754944e-38, %v901
    %v903 = vsel %vm900, %v902, %v898
    %v904 = vmul.f32 1.0, %v903
    %v905 = vtanh.pop %v885
    %v906 = vmul.f32 %v904, %v833
    %908 = vrot.lane.b32.xlu0 %v905, 64
    %v909 = vpop.permute.xlu0 %908
    %v911 = vmul.f32 %v904, %v909
    %913 = vrot.lane.b32.xlu0 %v911, 32
    %v914 = vpop.permute.xlu0 %913
    %v916 = vadd.f32 %v906, %v914
    %v917 = vmul.f32 %v916, %v916
    %920 = vrot.lane.b32.xlu0 %v916, 96
    %v921 = vpop.permute.xlu0 %920
    %922 = vrot.lane.b32.xlu0 %v917, 96
    %v923 = vpop.permute.xlu0 %922
    %v926 = vsel %vm344, %v921, 0.0
    %927 = vadd.xlane.f32.xlu0 %v926
    %v928 = vpop.xlane.xlu0 %927
    %v929 = vsel %vm344, %v923, 0.0
    %930 = vadd.xlane.f32.xlu0 %v929
    %v931 = vpop.xlane.xlu0 %930
    %v932 = vmul.f32 %v928, %v449
    %v933 = vmul.f32 %v931, %v449
    %v934 = vmul.f32 %v932, %v932
    %v935 = vsub.f32 %v933, %v934
    %v936 = vmax.f32 %v935, 0.0
    %v937 = vsub.f32 %v916, %v932
    %v938 = vadd.f32 %v936, 1e-05
    %v939 = vrsqrt.pop %v938
    %v940 = vmul.f32 %v939, %v938
    %v941 = vmul.f32 %v940, %v939
    %v942 = vmul.f32 0.5, %v941
    %v943 = vsub.f32 1.5, %v942
    %v944 = vmul.f32 %v939, %v943
    %vm945 = vweird.f32 %v938
    %vm946 = vweird.f32 %v939
    %vm947 = vmor %vm945, %vm946
    %v948 = vsel %vm947, %v939, %v944
    %v949 = vmul.f32 %v937, %v948
    %v950 = vmul.f32 %v949, %v471
    %v951 = vadd.f32 %v950, %v477
    %v952 = vtanh.pop %v951
    %954 = vrot.lane.b32.xlu0 %v952, 64
    %v955 = vpop.permute.xlu0 %954
    %v957 = vmul.f32 %v904, %v955
    %v958 = vpack.c.bf16 %v957, %v957
    %960 = vrot.lane.b32.xlu0 %v958, 32
    %v961 = vpop.permute.xlu0 %960
    %v963 = vsel %vm344, %v961, 0
    %965 = vmatpush.bf16.msra.mxu0 0
    %966 = vmatpush.bf16.msra.mxu0 0
    %967 = vmatpush.bf16.msra.mxu0 0
    %968 = vmatpush.bf16.msra.mxu0 0
    %969 = vmatpush.bf16.msra.mxu0 0
    %970 = vmatpush.bf16.msra.mxu0 0
    %971 = vmatpush.bf16.msra.mxu0 %v341
    %972 = vmatpush.bf16.msra.mxu0 %v340
    %973 = vmatmul.bf16.gmra.mxu0 %v963
    %v974 = vpop.f32.mrf.mxu0
    %v975 = vadd.f32 0.0, %v974
    %v976 = vpop.f32.mrf.mxu0
    %977 = vdwg.mxu0
    %v978 = vmul.f32 %v975, %v975
    %979 = vadd.xlane.f32.xlu0 %v975
    %v980 = vpop.xlane.xlu0 %979
    %981 = vadd.xlane.f32.xlu0 %v978
    %v982 = vpop.xlane.xlu0 %981
    %v983 = vmul.f32 %v980, %v154
    %v984 = vmul.f32 %v982, %v154
    %v985 = vmul.f32 %v983, %v983
    %v986 = vsub.f32 %v984, %v985
    %v987 = vmax.f32 %v986, 0.0
    %v988 = vsub.f32 %v975, %v983
    %v989 = vadd.f32 %v987, 1e-05
    %v990 = vrsqrt.pop %v989
    %v991 = vmul.f32 %v990, %v989
    %v992 = vmul.f32 %v991, %v990
    %v993 = vmul.f32 0.5, %v992
    %v994 = vsub.f32 1.5, %v993
    %v995 = vmul.f32 %v990, %v994
    %vm996 = vweird.f32 %v989
    %vm997 = vweird.f32 %v990
    %vm998 = vmor %vm996, %vm997
    %v999 = vsel %vm998, %v990, %v995
    %v1000 = vmul.f32 %v988, %v999
    %v1001 = vmul.f32 %v1000, %v385
    %v1002 = vadd.f32 %v1001, %v389
    %v1003 = vadd.f32 %v318, %v1002
    %v1004 = vxor.u32 %v1003, 2147483648
    %v1005 = vmul.f32 %v1004, 1.442695
    %v1006 = vpow.pop %v1005
    %v1007 = vadd.f32 %v1006, 1.0
    %v1008 = vrcp.pop %v1007
    %v1009 = vmul.f32 %v1007, %v1008
    %v1010 = vsub.f32 1.0, %v1009
    %v1011 = vmul.f32 %v1008, %v1010
    %v1012 = vadd.f32 %v1008, %v1011
    %vm1013 = vweird.f32 %v1007
    %vm1014 = vweird.f32 %v1008
    %vm1015 = vmor %vm1013, %vm1014
    %v1016 = vsel %vm1015, %v1008, %v1012
    %v1017 = vand.u32 2147483647, %v1007
    %vm1018 = vcmp.eq.f32.partialorder %v1017, 8.507059e+37
    %v1019 = vand.u32 %v1007, 2147483648
    %v1020 = vor.u32 1.1754944e-38, %v1019
    %v1021 = vsel %vm1018, %v1020, %v1016
    %v1022 = vmul.f32 1.0, %v1021
    %v1023 = vtanh.pop %v1003
    %v1024 = vmul.f32 %v1022, %v951
    %1026 = vrot.lane.b32.xlu0 %v1023, 64
    %v1027 = vpop.permute.xlu0 %1026
    %v1029 = vmul.f32 %v1022, %v1027
    %1031 = vrot.lane.b32.xlu0 %v1029, 32
    %v1032 = vpop.permute.xlu0 %1031
    %v1034 = vadd.f32 %v1024, %v1032
    %v1035 = vmul.f32 %v1034, %v1034
    %1038 = vrot.lane.b32.xlu0 %v1034, 96
    %v1039 = vpop.permute.xlu0 %1038
    %1040 = vrot.lane.b32.xlu0 %v1035, 96
    %v1041 = vpop.permute.xlu0 %1040
    %v1044 = vsel %vm344, %v1039, 0.0
    %1045 = vadd.xlane.f32.xlu0 %v1044
    %v1046 = vpop.xlane.xlu0 %1045
    %v1047 = vsel %vm344, %v1041, 0.0
    %1048 = vadd.xlane.f32.xlu0 %v1047
    %v1049 = vpop.xlane.xlu0 %1048
    %v1050 = vmul.f32 %v1046, %v449
    %v1051 = vmul.f32 %v1049, %v449
    %v1052 = vmul.f32 %v1050, %v1050
    %v1053 = vsub.f32 %v1051, %v1052
    %v1054 = vmax.f32 %v1053, 0.0
    %v1055 = vsub.f32 %v1034, %v1050
    %v1056 = vadd.f32 %v1054, 1e-05
    %v1057 = vrsqrt.pop %v1056
    %v1058 = vmul.f32 %v1057, %v1056
    %v1059 = vmul.f32 %v1058, %v1057
    %v1060 = vmul.f32 0.5, %v1059
    %v1061 = vsub.f32 1.5, %v1060
    %v1062 = vmul.f32 %v1057, %v1061
    %vm1063 = vweird.f32 %v1056
    %vm1064 = vweird.f32 %v1057
    %vm1065 = vmor %vm1063, %vm1064
    %v1066 = vsel %vm1065, %v1057, %v1062
    %v1067 = vmul.f32 %v1055, %v1066
    %v1068 = vmul.f32 %v1067, %v471
    %v1069 = vadd.f32 %v1068, %v477
    %v1070 = vtanh.pop %v1069
    %1072 = vrot.lane.b32.xlu0 %v1070, 64
    %v1073 = vpop.permute.xlu0 %1072
    %v1075 = vmul.f32 %v1022, %v1073
    %v1076 = vpack.c.bf16 %v1075, %v1075
    %1078 = vrot.lane.b32.xlu0 %v1076, 32
    %v1079 = vpop.permute.xlu0 %1078
    %v1081 = vsel %vm344, %v1079, 0
    %1083 = vmatpush.bf16.msra.mxu0 0
    %1084 = vmatpush.bf16.msra.mxu0 0
    %1085 = vmatpush.bf16.msra.mxu0 0
    %1086 = vmatpush.bf16.msra.mxu0 0
    %1087 = vmatpush.bf16.msra.mxu0 0
    %1088 = vmatpush.bf16.msra.mxu0 0
    %1089 = vmatpush.bf16.msra.mxu0 %v341
    %1090 = vmatpush.bf16.msra.mxu0 %v340
    %1091 = vmatmul.bf16.gmra.mxu0 %v1081
    %v1092 = vpop.f32.mrf.mxu0
    %v1093 = vadd.f32 0.0, %v1092
    %v1094 = vpop.f32.mrf.mxu0
    %1095 = vdwg.mxu0
    %v1096 = vmul.f32 %v1093, %v1093
    %1097 = vadd.xlane.f32.xlu0 %v1093
    %v1098 = vpop.xlane.xlu0 %1097
    %1099 = vadd.xlane.f32.xlu0 %v1096
    %v1100 = vpop.xlane.xlu0 %1099
    %v1101 = vmul.f32 %v1098, %v154
    %v1102 = vmul.f32 %v1100, %v154
    %v1103 = vmul.f32 %v1101, %v1101
    %v1104 = vsub.f32 %v1102, %v1103
    %v1105 = vmax.f32 %v1104, 0.0
    %v1106 = vsub.f32 %v1093, %v1101
    %v1107 = vadd.f32 %v1105, 1e-05
    %v1108 = vrsqrt.pop %v1107
    %v1109 = vmul.f32 %v1108, %v1107
    %v1110 = vmul.f32 %v1109, %v1108
    %v1111 = vmul.f32 0.5, %v1110
    %v1112 = vsub.f32 1.5, %v1111
    %v1113 = vmul.f32 %v1108, %v1112
    %vm1114 = vweird.f32 %v1107
    %vm1115 = vweird.f32 %v1108
    %vm1116 = vmor %vm1114, %vm1115
    %v1117 = vsel %vm1116, %v1108, %v1113
    %v1118 = vmul.f32 %v1106, %v1117
    %v1119 = vmul.f32 %v1118, %v385
    %v1120 = vadd.f32 %v1119, %v389
    %v1121 = vadd.f32 %v319, %v1120
    %v1122 = vxor.u32 %v1121, 2147483648
    %v1123 = vmul.f32 %v1122, 1.442695
    %v1124 = vpow.pop %v1123
    %v1125 = vadd.f32 %v1124, 1.0
    %v1126 = vrcp.pop %v1125
    %v1127 = vmul.f32 %v1125, %v1126
    %v1128 = vsub.f32 1.0, %v1127
    %v1129 = vmul.f32 %v1126, %v1128
    %v1130 = vadd.f32 %v1126, %v1129
    %vm1131 = vweird.f32 %v1125
    %vm1132 = vweird.f32 %v1126
    %vm1133 = vmor %vm1131, %vm1132
    %v1134 = vsel %vm1133, %v1126, %v1130
    %v1135 = vand.u32 2147483647, %v1125
    %vm1136 = vcmp.eq.f32.partialorder %v1135, 8.507059e+37
    %v1137 = vand.u32 %v1125, 2147483648
    %v1138 = vor.u32 1.1754944e-38, %v1137
    %v1139 = vsel %vm1136, %v1138, %v1134
    %v1140 = vmul.f32 1.0, %v1139
    %v1141 = vtanh.pop %v1121
    %v1142 = vmul.f32 %v1140, %v1069
    %1144 = vrot.lane.b32.xlu0 %v1141, 64
    %v1145 = vpop.permute.xlu0 %1144
    %v1147 = vmul.f32 %v1140, %v1145
    %1149 = vrot.lane.b32.xlu0 %v1147, 32
    %v1150 = vpop.permute.xlu0 %1149
    %v1152 = vadd.f32 %v1142, %v1150
    %v1153 = vmul.f32 %v1152, %v1152
    %1156 = vrot.lane.b32.xlu0 %v1152, 96
    %v1157 = vpop.permute.xlu0 %1156
    %1158 = vrot.lane.b32.xlu0 %v1153, 96
    %v1159 = vpop.permute.xlu0 %1158
    %v1162 = vsel %vm344, %v1157, 0.0
    %1163 = vadd.xlane.f32.xlu0 %v1162
    %v1164 = vpop.xlane.xlu0 %1163
    %v1165 = vsel %vm344, %v1159, 0.0
    %1166 = vadd.xlane.f32.xlu0 %v1165
    %v1167 = vpop.xlane.xlu0 %1166
    %v1168 = vmul.f32 %v1164, %v449
    %v1169 = vmul.f32 %v1167, %v449
    %v1170 = vmul.f32 %v1168, %v1168
    %v1171 = vsub.f32 %v1169, %v1170
    %v1172 = vmax.f32 %v1171, 0.0
    %v1173 = vsub.f32 %v1152, %v1168
    %v1174 = vadd.f32 %v1172, 1e-05
    %v1175 = vrsqrt.pop %v1174
    %v1176 = vmul.f32 %v1175, %v1174
    %v1177 = vmul.f32 %v1176, %v1175
    %v1178 = vmul.f32 0.5, %v1177
    %v1179 = vsub.f32 1.5, %v1178
    %v1180 = vmul.f32 %v1175, %v1179
    %vm1181 = vweird.f32 %v1174
    %vm1182 = vweird.f32 %v1175
    %vm1183 = vmor %vm1181, %vm1182
    %v1184 = vsel %vm1183, %v1175, %v1180
    %v1185 = vmul.f32 %v1173, %v1184
    %v1186 = vmul.f32 %v1185, %v471
    %v1187 = vadd.f32 %v1186, %v477
    %v1188 = vtanh.pop %v1187
    %1190 = vrot.lane.b32.xlu0 %v1188, 64
    %v1191 = vpop.permute.xlu0 %1190
    %v1193 = vmul.f32 %v1140, %v1191
    %v1194 = vpack.c.bf16 %v1193, %v1193
    %1196 = vrot.lane.b32.xlu0 %v1194, 32
    %v1197 = vpop.permute.xlu0 %1196
    %v1199 = vsel %vm344, %v1197, 0
    %1201 = vmatpush.bf16.msra.mxu0 0
    %1202 = vmatpush.bf16.msra.mxu0 0
    %1203 = vmatpush.bf16.msra.mxu0 0
    %1204 = vmatpush.bf16.msra.mxu0 0
    %1205 = vmatpush.bf16.msra.mxu0 0
    %1206 = vmatpush.bf16.msra.mxu0 0
    %1207 = vmatpush.bf16.msra.mxu0 %v341
    %1208 = vmatpush.bf16.msra.mxu0 %v340
    %1209 = vmatmul.bf16.gmra.mxu0 %v1199
    %v1210 = vpop.f32.mrf.mxu0
    %v1211 = vadd.f32 0.0, %v1210
    %v1212 = vpop.f32.mrf.mxu0
    %1213 = vdwg.mxu0
    %v1214 = vmul.f32 %v1211, %v1211
    %1215 = vadd.xlane.f32.xlu0 %v1211
    %v1216 = vpop.xlane.xlu0 %1215
    %1217 = vadd.xlane.f32.xlu0 %v1214
    %v1218 = vpop.xlane.xlu0 %1217
    %v1219 = vmul.f32 %v1216, %v154
    %v1220 = vmul.f32 %v1218, %v154
    %v1221 = vmul.f32 %v1219, %v1219
    %v1222 = vsub.f32 %v1220, %v1221
    %v1223 = vmax.f32 %v1222, 0.0
    %v1224 = vsub.f32 %v1211, %v1219
    %v1225 = vadd.f32 %v1223, 1e-05
    %v1226 = vrsqrt.pop %v1225
    %v1227 = vmul.f32 %v1226, %v1225
    %v1228 = vmul.f32 %v1227, %v1226
    %v1229 = vmul.f32 0.5, %v1228
    %v1230 = vsub.f32 1.5, %v1229
    %v1231 = vmul.f32 %v1226, %v1230
    %vm1232 = vweird.f32 %v1225
    %vm1233 = vweird.f32 %v1226
    %vm1234 = vmor %vm1232, %vm1233
    %v1235 = vsel %vm1234, %v1226, %v1231
    %v1236 = vmul.f32 %v1224, %v1235
    %v1237 = vmul.f32 %v1236, %v385
    %v1238 = vadd.f32 %v1237, %v389
    %v1239 = vadd.f32 %v320, %v1238
    %v1240 = vxor.u32 %v1239, 2147483648
    %v1241 = vmul.f32 %v1240, 1.442695
    %v1242 = vpow.pop %v1241
    %v1243 = vadd.f32 %v1242, 1.0
    %v1244 = vrcp.pop %v1243
    %v1245 = vmul.f32 %v1243, %v1244
    %v1246 = vsub.f32 1.0, %v1245
    %v1247 = vmul.f32 %v1244, %v1246
    %v1248 = vadd.f32 %v1244, %v1247
    %vm1249 = vweird.f32 %v1243
    %vm1250 = vweird.f32 %v1244
    %vm1251 = vmor %vm1249, %vm1250
    %v1252 = vsel %vm1251, %v1244, %v1248
    %v1253 = vand.u32 2147483647, %v1243
    %vm1254 = vcmp.eq.f32.partialorder %v1253, 8.507059e+37
    %v1255 = vand.u32 %v1243, 2147483648
    %v1256 = vor.u32 1.1754944e-38, %v1255
    %v1257 = vsel %vm1254, %v1256, %v1252
    %v1258 = vmul.f32 1.0, %v1257
    %v1259 = vtanh.pop %v1239
    %v1260 = vmul.f32 %v1258, %v1187
    %1262 = vrot.lane.b32.xlu0 %v1259, 64
    %v1263 = vpop.permute.xlu0 %1262
    %v1265 = vmul.f32 %v1258, %v1263
    %1267 = vrot.lane.b32.xlu0 %v1265, 32
    %v1268 = vpop.permute.xlu0 %1267
    %v1270 = vadd.f32 %v1260, %v1268
    %v1271 = vmul.f32 %v1270, %v1270
    %1274 = vrot.lane.b32.xlu0 %v1270, 96
    %v1275 = vpop.permute.xlu0 %1274
    %1276 = vrot.lane.b32.xlu0 %v1271, 96
    %v1277 = vpop.permute.xlu0 %1276
    %v1280 = vsel %vm344, %v1275, 0.0
    %1281 = vadd.xlane.f32.xlu0 %v1280
    %v1282 = vpop.xlane.xlu0 %1281
    %v1283 = vsel %vm344, %v1277, 0.0
    %1284 = vadd.xlane.f32.xlu0 %v1283
    %v1285 = vpop.xlane.xlu0 %1284
    %v1286 = vmul.f32 %v1282, %v449
    %v1287 = vmul.f32 %v1285, %v449
    %v1288 = vmul.f32 %v1286, %v1286
    %v1289 = vsub.f32 %v1287, %v1288
    %v1290 = vmax.f32 %v1289, 0.0
    %v1291 = vsub.f32 %v1270, %v1286
    %v1292 = vadd.f32 %v1290, 1e-05
    %v1293 = vrsqrt.pop %v1292
    %v1294 = vmul.f32 %v1293, %v1292
    %v1295 = vmul.f32 %v1294, %v1293
    %v1296 = vmul.f32 0.5, %v1295
    %v1297 = vsub.f32 1.5, %v1296
    %v1298 = vmul.f32 %v1293, %v1297
    %vm1299 = vweird.f32 %v1292
    %vm1300 = vweird.f32 %v1293
    %vm1301 = vmor %vm1299, %vm1300
    %v1302 = vsel %vm1301, %v1293, %v1298
    %v1303 = vmul.f32 %v1291, %v1302
    %v1304 = vmul.f32 %v1303, %v471
    %v1305 = vadd.f32 %v1304, %v477
    %v1306 = vtanh.pop %v1305
    %1308 = vrot.lane.b32.xlu0 %v1306, 64
    %v1309 = vpop.permute.xlu0 %1308
    %v1311 = vmul.f32 %v1258, %v1309
    %1313 = vrot.lane.b32.xlu0 %v485, 32
    %v1314 = vpop.permute.xlu0 %1313
    %1317 = vrot.lane.b32.xlu0 %v603, 64
    %v1318 = vpop.permute.xlu0 %1317
    %1321 = vrot.lane.b32.xlu0 %v721, 96
    %v1322 = vpop.permute.xlu0 %1321
    %1325 = vrot.lane.b32.xlu0 %v957, 32
    %v1326 = vpop.permute.xlu0 %1325
    %1329 = vrot.lane.b32.xlu0 %v1075, 64
    %v1330 = vpop.permute.xlu0 %1329
    %1333 = vrot.lane.b32.xlu0 %v1193, 96
    %v1334 = vpop.permute.xlu0 %1333
    %v1336 = vsel %vm344, %v1314, %v1318
    %vm1337 = vcmask 523264
    %v1338 = vsel %vm1337, %v1336, %v1322
    %vm1339 = vcmask 785408
    %v1340 = vsel %vm1339, %v1338, %v839
    %v1341 = vsel %vm344, %v1326, %v1330
    %v1342 = vsel %vm1337, %v1341, %v1334
    %v1343 = vsel %vm1339, %v1342, %v1311
    %1344 = vst [vmem:[#allocation2] sm:$0xff] %v1340
    %1345 = vst [vmem:[#allocation2 + $0x8] sm:$0xff] %v1343
    %1347 = vrot.lane.b32.xlu0 %v1311, 32
    %v1348 = vpop.permute.xlu0 %1347
    %1350 = vst.msk [vmem:[#allocation4] sm:$0xff] %vm344, %v1348
    %1352 = vrot.lane.b32.xlu0 %v1305, 96
    %v1353 = vpop.permute.xlu0 %1352
    %1355 = vst.msk [vmem:[#allocation6] sm:$0xff] %vm344, %v1353
    // Predicated region
    $region46: #{tpu_custom_call.1} parent=1 // pred_check
      _
    $region47: #{tpu_custom_call.1} parent=1 // pred_check_branch
      %1357 = sbr.rel (0) target = $region49
    $region48: #{tpu_custom_call.1} parent=1 // pred_region
      %1359 = vsyncadd [#allocation3], 0
      %s1361 = sshll.u32 [#allocation2], 4
      %s1362 = int_to_ptr.vmem [resolvable:$true] %s1361
      %s1363 = sshll.u32 %s11, 4
      %s1364 = int_to_ptr.hbm [resolvable:$true] %s1363
      %1366 = dma.vmem_to_hbm [thread:$0]  %s1362, 256, %s1364, [#allocation3]
    $region49: #{tpu_custom_call.1} parent=1 // pred_fallthru
      _
    // Predicated region
    $region50: #{tpu_custom_call.1} parent=1 // pred_check
      _
    $region51: #{tpu_custom_call.1} parent=1 // pred_check_branch
      %1368 = sbr.rel (0) target = $region53
    $region52: #{tpu_custom_call.1} parent=1 // pred_region
      %1370 = vsyncadd [#allocation5], 0
      %s1372 = sshll.u32 [#allocation4], 4
      %s1373 = int_to_ptr.vmem [resolvable:$true] %s1372
      %s1374 = sshll.u32 %s12, 4
      %s1375 = int_to_ptr.hbm [resolvable:$true] %s1374
      %1377 = dma.vmem_to_hbm [thread:$0]  %s1373, 128, %s1375, [#allocation5]
    $region53: #{tpu_custom_call.1} parent=1 // pred_fallthru
      _
    // Predicated region
    $region54: #{tpu_custom_call.1} parent=1 // pred_check
      _
    $region55: #{tpu_custom_call.1} parent=1 // pred_check_branch
      %1379 = sbr.rel (0) target = $region57
    $region56: #{tpu_custom_call.1} parent=1 // pred_region
      %1381 = vsyncadd [#allocation5], 0
      %s1383 = sshll.u32 [#allocation6], 4
      %s1384 = int_to_ptr.vmem [resolvable:$true] %s1383
      %s1385 = sshll.u32 %s13, 4
      %s1386 = int_to_ptr.hbm [resolvable:$true] %s1385
      %1388 = dma.vmem_to_hbm [thread:$0]  %s1384, 128, %s1386, [#allocation5]
    $region57: #{tpu_custom_call.1} parent=1 // pred_fallthru
      _
    // Predicated region
    $region58: #{tpu_custom_call.1} parent=1 // pred_check
      _
    $region59: #{tpu_custom_call.1} parent=1 // pred_check_branch
      %1390 = sbr.rel (0) target = $region61
    $region60: #{tpu_custom_call.1} parent=1 // pred_region
      %1392 = dma.done [#allocation3], 256
    $region61: #{tpu_custom_call.1} parent=1 // pred_fallthru
      _
    // Predicated region
    $region62: #{tpu_custom_call.1} parent=1 // pred_check
      _
    $region63: #{tpu_custom_call.1} parent=1 // pred_check_branch
      %1394 = sbr.rel (0) target = $region65
    $region64: #{tpu_custom_call.1} parent=1 // pred_region
      %1396 = dma.done [#allocation5], 128
    $region65: #{tpu_custom_call.1} parent=1 // pred_fallthru
      _
    // Predicated region
    $region66: #{tpu_custom_call.1} parent=1 // pred_check
      _
    $region67: #{tpu_custom_call.1} parent=1 // pred_check_branch
      %1398 = sbr.rel (0) target = $region69
    $region68: #{tpu_custom_call.1} parent=1 // pred_region
      %1400 = dma.done [#allocation5], 128
    $region69: #{tpu_custom_call.1} parent=1 // pred_fallthru
      _
    %1401 = vsyncpa [#allocation3], 1
    %1402 = vsyncpa [#allocation5], 1

</llo_original>
